<compile_context>
chip_gen: v7x
topology: tpu7x:2x2x1
jax: 0.10.0
libtpu: 0.0.40
codegen_flags: <defaults>
</compile_context>

<pallas_src>
import functools
import numpy as np
import jax
import jax.numpy as jnp
from jax import lax
from jax.experimental import pallas as pl
from jax.experimental.pallas import tpu as pltpu

BOTTLENECK_EXPANSION = 4


def _round_up(x, m):
    return -(-x // m) * m


@functools.lru_cache(maxsize=None)
def _vmem_config():
    """Generation-aware (vmem_limit_bytes, per-call working-set budget)."""
    try:
        cap = int(pltpu.get_tpu_info().vmem_capacity_bytes)
    except Exception:
        cap = 0
    if cap >= 96 * 1024 * 1024:            # v5e / v6e: 128 MiB physical VMEM
        limit = 96 * 1024 * 1024
    else:                                   # v7x (64 MiB / TC) or unknown
        limit = 44 * 1024 * 1024
    return limit, int(limit * 0.62)


# ----------------------------------------------------------------------------
# Fused GEMM + bias + optional residual + optional ReLU kernel
# ----------------------------------------------------------------------------
def _gemm_kernel(a_ref, w_ref, b_ref, *rest, relu, has_res):
    if has_res:
        r_ref, o_ref, acc_ref = rest
    else:
        o_ref, acc_ref = rest

    k = pl.program_id(2)

    @pl.when(k == 0)
    def _():
        acc_ref[...] = jnp.zeros_like(acc_ref)

    acc_ref[...] += jnp.dot(a_ref[...], w_ref[...],
                            preferred_element_type=jnp.float32)

    @pl.when(k == pl.num_programs(2) - 1)
    def _():
        y = acc_ref[...] + b_ref[...]
        if has_res:
            y = y + r_ref[...].astype(jnp.float32)
        if relu:
            y = jnp.maximum(y, 0.0)
        o_ref[...] = y.astype(o_ref.dtype)


def _candidate_tiles(dim, cap, granule):
    """Divisor tiles of `dim` (multiples of granule) up to cap, descending."""
    out = []
    hi = min(cap, dim)
    hi -= hi % granule
    for t in range(hi, granule - 1, -granule):
        if dim % t == 0:
            out.append(t)
    if not out:                      # tiny / awkward dim -> pad up
        out.append(min(_round_up(dim, granule), cap))
    return out[:8]


def _fits_vmem(tm, tk, tn, has_res, budget):
    a = 2 * tm * tk * 2              # double-buffered bf16 A tile
    wgt = 2 * tk * tn * 2            # double-buffered bf16 W tile
    b = 2 * tn * 4                   # f32 bias
    out = 2 * tm * tn * 2            # bf16 output tile
    acc = tm * tn * 4                # f32 accumulator scratch
    res = 2 * tm * tn * 2 if has_res else 0
    return a + wgt + b + out + acc + res <= budget


def _select_gemm_tiles(M, K, N, has_res, budget):
    """Minimize modeled HBM traffic subject to the VMEM working-set budget."""
    tm_cands = _candidate_tiles(M, 512, 8)
    tn_cands = []
    for t in (N, 1024, 512, 256, 128):
        if t <= N and N % t == 0 and t not in tn_cands:
            tn_cands.append(t)
    tk_cands = []
    for t in (K, 1024, 512, 256, 128):
        if t <= K and K % t == 0 and t not in tk_cands:
            tk_cands.append(t)

    best_key, best = None, None
    for tm in tm_cands:
        Mp = _round_up(M, tm)
        for tn in tn_cands:
            Np = _round_up(N, tn)
            for tk in tk_cands:
                Kp = _round_up(K, tk)
                if not _fits_vmem(tm, tk, tn, has_res, budget):
                    continue
                traffic = (Mp * Kp * 2) * (Np // tn)      # A refetched per j-tile
                traffic += (Kp * Np * 2) * (Mp // tm)     # W refetched per i-tile
                traffic += Mp * Np * 2                    # output store
                if has_res:
                    traffic += Mp * Np * 2
                if Mp != M:                               # wrapper-side pad copies
                    traffic += 2 * M * K * 2 + (2 * M * N * 2 if has_res else 0)
                if Mp != M or Np != N:                    # output slice-back copy
                    traffic += 2 * M * N * 2
                steps = (Mp // tm) * (Np // tn) * (Kp // tk)
                key = (traffic, steps, -(tm * tn))
                if best_key is None or key < best_key:
                    best_key, best = key, (tm, tn, tk)
    if best is None:                                      # pathological fallback
        best = (tm_cands[-1],
                128 if N % 128 == 0 else N,
                128 if K % 128 == 0 else K)
    return best


def gemm_bias_act(a, w, bias, *, relu, residual=None, out_dtype=jnp.bfloat16):
    """out = act(a @ w + bias [+ residual]).  a:[M,K] bf16, w:[K,N] bf16."""
    M, K = a.shape
    N = w.shape[1]
    has_res = residual is not None
    vmem_limit, budget = _vmem_config()

    TM, TN, TK = _select_gemm_tiles(M, K, N, has_res, budget)
    Mp, Kp, Np = _round_up(M, TM), _round_up(K, TK), _round_up(N, TN)

    a_p = a if (Mp == M and Kp == K) else jnp.pad(a, ((0, Mp - M), (0, Kp - K)))
    w_p = w if (Kp == K and Np == N) else jnp.pad(w, ((0, Kp - K), (0, Np - N)))
    b_p = bias if Np == N else jnp.pad(bias, (0, Np - N))
    b_p = b_p.reshape(1, Np).astype(jnp.float32)

    inputs = [a_p.astype(jnp.bfloat16), w_p.astype(jnp.bfloat16), b_p]
    in_specs = [
        pl.BlockSpec((TM, TK), lambda i, j, k: (i, k)),
        pl.BlockSpec((TK, TN), lambda i, j, k: (k, j)),
        pl.BlockSpec((1, TN), lambda i, j, k: (0, j)),
    ]
    if has_res:
        r_p = residual if (Mp == M and Np == N) else jnp.pad(
            residual, ((0, Mp - M), (0, Np - N)))
        inputs.append(r_p.astype(jnp.bfloat16))
        in_specs.append(pl.BlockSpec((TM, TN), lambda i, j, k: (i, j)))

    grid = (Mp // TM, Np // TN, Kp // TK)
    out = pl.pallas_call(
        functools.partial(_gemm_kernel, relu=relu, has_res=has_res),
        out_shape=jax.ShapeDtypeStruct((Mp, Np), out_dtype),
        grid_spec=pltpu.PrefetchScalarGridSpec(
            num_scalar_prefetch=0,
            grid=grid,
            in_specs=in_specs,
            out_specs=pl.BlockSpec((TM, TN), lambda i, j, k: (i, j)),
            scratch_shapes=[pltpu.VMEM((TM, TN), jnp.float32)]),
        compiler_params=pltpu.CompilerParams(
            dimension_semantics=("parallel", "parallel", "arbitrary"),
            vmem_limit_bytes=vmem_limit),
    )(*inputs)
    if Mp != M or Np != N:
        out = out[:M, :N]
    return out


# ----------------------------------------------------------------------------
# Direct KxK conv kernel (phase-decomposed input; fused row taps for small cin)
# ----------------------------------------------------------------------------
def _conv_direct_kernel(x_ref, w_ref, b_ref, o_ref, acc_ref, *, k, s, B, relu,
                        fuse_w):
    rows = acc_ref.shape[0]
    acc_ref[...] = jnp.zeros_like(acc_ref)
    for di in range(k):
        if fuse_w:
            # concat the kw taps of this row along channels -> one deep dot
            taps = []
            for dj in range(k):
                ph = (di % s) * s + (dj % s)
                base = (di // s) * B + (dj // s)
                taps.append(x_ref[ph, 0, base:base + rows, :])
            xt = jnp.concatenate(taps, axis=-1)              # (rows, kw*cin)
            acc_ref[...] += jnp.dot(xt, w_ref[di],
                                    preferred_element_type=jnp.float32)
        else:
            for dj in range(k):
                ph = (di % s) * s + (dj % s)
                base = (di // s) * B + (dj // s)
                xt = x_ref[ph, 0, base:base + rows, :]       # (rows, cin)
                acc_ref[...] += jnp.dot(xt, w_ref[di, dj],
                                        preferred_element_type=jnp.float32)
    y = acc_ref[...] + b_ref[...]
    if relu:
        y = jnp.maximum(y, 0.0)
    o_ref[0] = y.astype(o_ref.dtype)


def _make_phases_flat(x, k, s, pad):
    """Space-to-batch phase decomposition, spatially flattened per phase.

    Height is over-padded by one extra phase-row so the in-kernel shifted
    slices never run off the end (no second pad pass needed)."""
    n, h, w, c = x.shape
    ho = (h + 2 * pad - k) // s + 1
    wo = (w + 2 * pad - k) // s + 1
    off = (k - 1) // s
    A, B = ho + off, wo + off
    hpp, wpp = s * (A + 1), s * B
    xp = jnp.pad(x, ((0, 0), (pad, hpp - h - pad), (pad, wpp - w - pad),
                     (0, 0)))
    if s == 1:                      # single phase: just a pad + free reshape
        flat = xp.reshape(1, n, (A + 1) * B, c)
    else:
        phases = jnp.stack([xp[:, p::s, q::s, :]
                            for p in range(s) for q in range(s)], axis=0)
        flat = phases.reshape(s * s, n, (A + 1) * B, c)
    return flat, ho, wo, B


def conv_direct(x, w, bias, *, stride, pad, relu):
    kh, kw, cin, cout = w.shape
    # channel-pad to sublane granularity (only the 3-channel stem needs this)
    if cin % 8 != 0:
        cp = _round_up(cin, 8) - cin
        x = jnp.pad(x, ((0, 0), (0, 0), (0, 0), (0, cp)))
        w = jnp.pad(w, ((0, 0), (0, 0), (0, cp), (0, 0)))
        cin += cp

    vmem_limit, budget = _vmem_config()
    flat, ho, wo, B = _make_phases_flat(x, kh, stride, pad)
    s2, n, L, _ = flat.shape
    rows = ho * B                                   # includes B - wo junk cols

    # output-channel tile (full-dim fallback keeps any width correct)
    if cout <= 256 or cout % 128 != 0:
        TN = cout
    elif cout % 256 == 0:
        TN = 256
    else:
        TN = 128

    fuse_w = cin in (64, 128)       # fused taps: 1/kw the acc RMWs, deeper MXU K

    def conv_fits(tn):
        xb = 2 * s2 * L * cin * 2
        wb = 2 * kh * kw * cin * tn * 2
        ob = 2 * rows * tn * 2
        acc = rows * tn * 4
        cat = rows * kw * cin * 2 if fuse_w else 0
        return xb + wb + ob + acc + cat + 2 * tn * 4 <= budget

    while TN > 128 and cout % (TN // 2) == 0 and not conv_fits(TN):
        TN //= 2
    grid = (cout // TN, n)          # batch fastest: weight tile stays resident

    if fuse_w:
        w_in = w.reshape(kh, kw * cin, cout).astype(jnp.bfloat16)
        w_spec = pl.BlockSpec((kh, kw * cin, TN), lambda j, b: (0, 0, j))
    else:
        w_in = w.astype(jnp.bfloat16)
        w_spec = pl.BlockSpec((kh, kw, cin, TN), lambda j, b: (0, 0, 0, j))

    out = pl.pallas_call(
        functools.partial(_conv_direct_kernel, k=kh, s=stride, B=B,
                          relu=relu, fuse_w=fuse_w),
        out_shape=jax.ShapeDtypeStruct((n, rows, cout), jnp.bfloat16),
        grid_spec=pltpu.PrefetchScalarGridSpec(
            num_scalar_prefetch=0,
            grid=grid,
            in_specs=[
                pl.BlockSpec((s2, 1, L, cin), lambda j, b: (0, b, 0, 0)),
                w_spec,
                pl.BlockSpec((1, TN), lambda j, b: (0, j)),
            ],
            out_specs=pl.BlockSpec((1, rows, TN), lambda j, b: (b, 0, j)),
            scratch_shapes=[pltpu.VMEM((rows, TN), jnp.float32)]),
        compiler_params=pltpu.CompilerParams(
            dimension_semantics=("parallel", "parallel"),
            vmem_limit_bytes=vmem_limit),
    )(flat.astype(jnp.bfloat16), w_in,
      bias.reshape(1, cout).astype(jnp.float32))

    # TODO(synk): drop the junk columns in-kernel to avoid this extra HBM pass.
    return out.reshape(n, ho, B, cout)[:, :, :wo, :]


# ----------------------------------------------------------------------------
# Conv dispatch
# ----------------------------------------------------------------------------
def conv1x1(x, w, bias, *, stride, relu, residual=None):
    if stride > 1:
        x = x[:, ::stride, ::stride, :]
    n, h, wd, c = x.shape
    cout = w.shape[-1]
    a = x.reshape(n * h * wd, c)
    wm = w.reshape(c, cout)
    r = residual.reshape(n * h * wd, cout) if residual is not None else None
    out = gemm_bias_act(a, wm, bias, relu=relu, residual=r)
    return out.reshape(n, h, wd, cout)


def conv_bn(x, p, *, stride, pad, relu, residual=None):
    w, bias = p['w'], p['bias']
    kh, kw, _, _ = w.shape
    if kh == 1 and kw == 1:
        return conv1x1(x, w, bias, stride=stride, relu=relu, residual=residual)
    assert residual is None
    return conv_direct(x, w, bias, stride=stride, pad=pad, relu=relu)


# ----------------------------------------------------------------------------
# Parameters (deterministic synthetic init; eval-mode BN folded into w / bias)
# ----------------------------------------------------------------------------
def make_conv_bn_params(key, cin, cout, kh, kw):
    k1, k2, k3 = jax.random.split(key, 3)
    fan_in = kh * kw * cin
    w = jax.random.normal(k1, (kh, kw, cin, cout), jnp.float32) / np.sqrt(fan_in)
    gamma = 1.0 + 0.1 * jax.random.normal(k2, (cout,), jnp.float32)
    beta = 0.1 * jax.random.normal(k3, (cout,), jnp.float32)
    running_mean = jnp.zeros((cout,), jnp.float32)
    running_var = jnp.ones((cout,), jnp.float32)
    eps = 1e-5
    scale = gamma / jnp.sqrt(running_var + eps)
    bias = beta - running_mean * scale
    return {'w': (w * scale).astype(jnp.bfloat16),     # BN scale folded into W
            'bias': bias.astype(jnp.float32)}


def make_resnet(key, num_blocks=(1, 1, 1, 1)):
    key, k_stem = jax.random.split(key)
    params = {'stem': make_conv_bn_params(k_stem, 3, 64, 7, 7), 'layers': []}
    config = []                              # static: (stride, has_down) per block
    inplanes = 64
    for planes, nb, stride in zip((64, 128, 256, 512), num_blocks,
                                  (1, 2, 2, 2)):
        layer_p, layer_c = [], []
        for b in range(nb):
            key, k1, k2, k3, k4 = jax.random.split(key, 5)
            s = stride if b == 0 else 1
            outp = planes * BOTTLENECK_EXPANSION
            has_down = (s != 1) or (inplanes != outp)
            blk = {'c1': make_conv_bn_params(k1, inplanes, planes, 1, 1),
                   'c2': make_conv_bn_params(k2, planes, planes, 3, 3),
                   'c3': make_conv_bn_params(k3, planes, outp, 1, 1)}
            if has_down:
                blk['down'] = make_conv_bn_params(k4, inplanes, outp, 1, 1)
            layer_p.append(blk)
            layer_c.append((s, has_down))
            inplanes = outp
        params['layers'].append(layer_p)
        config.append(tuple(layer_c))
    return params, tuple(config)


# ----------------------------------------------------------------------------
# Forward pass (matches ResNet.forward: stem -> layer1..4, no avgpool/fc)
# ----------------------------------------------------------------------------
def bottleneck_forward(x, p, stride, has_down):
    out = conv_bn(x, p['c1'], stride=1, pad=0, relu=True)
    out = conv_bn(out, p['c2'], stride=stride, pad=1, relu=True)
    if has_down:
        identity = conv_bn(x, p['down'], stride=stride, pad=0, relu=False)
    else:
        identity = x
    # conv3 + bn3 + residual add + ReLU fused in one Pallas GEMM kernel
    out = conv_bn(out, p['c3'], stride=1, pad=0, relu=True, residual=identity)
    return out


def resnet_forward(x_nchw, params, *, config):
    x = jnp.transpose(x_nchw, (0, 2, 3, 1)).astype(jnp.bfloat16)  # NCHW->NHWC
    out = conv_bn(x, params['stem'], stride=2, pad=3, relu=True)
    for layer_p, layer_c in zip(params['layers'], config):
        for blk_p, (s, has_down) in zip(layer_p, layer_c):
            out = bottleneck_forward(out, blk_p, s, has_down)
    return jnp.transpose(out, (0, 3, 1, 2)).astype(jnp.float32)   # NHWC->NCHW


# ----------------------------------------------------------------------------
def _conv_ref_nhwc(x, w, b, stride, pad):
    y = lax.conv_general_dilated(
        x.astype(jnp.float32), w.astype(jnp.float32),
        window_strides=(stride, stride),
        padding=((pad, pad), (pad, pad)),
        dimension_numbers=('NHWC', 'HWIO', 'NHWC'))
    return y + b.reshape(1, 1, 1, -1)


if __name__ == "__main__":
    key = jax.random.PRNGKey(0)
    key, kx = jax.random.split(key)

    # --- small correctness checks of the direct-conv kernel vs XLA reference ---
    # (fused taps s=1 and s=2, and the channel-padded 7x7 stem path)
    for (cin_t, k_t, s_t, p_t) in ((64, 3, 1, 1), (64, 3, 2, 1), (3, 7, 2, 3)):
        key, ka, kb = jax.random.split(key, 3)
        xt = jax.random.normal(ka, (1, 12, 12, cin_t),
                               jnp.float32).astype(jnp.bfloat16)
        wt = (jax.random.normal(kb, (k_t, k_t, cin_t, 32), jnp.float32)
              / np.sqrt(k_t * k_t * cin_t)).astype(jnp.bfloat16)
        bt = jnp.zeros((32,), jnp.float32)
        got = conv_direct(xt, wt, bt, stride=s_t, pad=p_t,
                          relu=False).astype(jnp.float32)
        ref = _conv_ref_nhwc(xt, wt, bt, s_t, p_t)
        assert np.allclose(np.asarray(got), np.asarray(ref),
                           atol=7e-2, rtol=7e-2), (cin_t, k_t, s_t)

    # --- full backbone: small input consistent with the module (NCHW, 3 ch) ---
    x = jax.random.normal(kx, (2, 3, 32, 32), jnp.float32)
    params, config = make_resnet(key, num_blocks=(1, 1, 1, 1))

    fwd = jax.jit(functools.partial(resnet_forward, config=config))
    out = jax.block_until_ready(fwd(x, params))

    # Backbone output: out_channels = 2048, spatial reduced by 16x (no maxpool).
    assert out.shape == (2, 2048, 2, 2), out.shape
    assert bool(jnp.all(jnp.isfinite(out)))
    print("KERNEL_OK")
</pallas_src>

<mosaic_0001>
module attributes {stable_mosaic.version = 11 : i64} {
  func.func @_conv_direct_kernel(%arg0: i32, %arg1: i32, %arg2: memref<1x1x210x64xbf16, #tpu.memory_space<vmem>>, %arg3: memref<3x192x32xbf16, #tpu.memory_space<vmem>>, %arg4: memref<1x32xf32, #tpu.memory_space<vmem>>, %arg5: memref<1x168x32xbf16, #tpu.memory_space<vmem>>, %arg6: memref<168x32xf32, #tpu.memory_space<vmem>>) attributes {dimension_semantics = [#tpu.dimension_semantics<parallel>, #tpu.dimension_semantics<parallel>], iteration_bounds = array<i64: 1, 1>, scalar_prefetch = 0 : i64, scratch_operands = 1 : i64, tpu.core_type = #tpu.core_type<tc>, window_params = [{transform_indices = @transform_0, window_bounds = array<i64: 1, 1, 210, 64>}, {transform_indices = @transform_1, window_bounds = array<i64: 3, 192, 32>}, {transform_indices = @transform_2, window_bounds = array<i64: 1, 32>}, {transform_indices = @transform_3, window_bounds = array<i64: 1, 168, 32>}]} {
    %cst = arith.constant 0.000000e+00 : f32
    %0 = vector.broadcast %cst : f32 to vector<168x32xf32>
    %c0 = arith.constant 0 : index
    %c0_0 = arith.constant 0 : index
    %1 = vector.load %arg6[%c0, %c0_0] : memref<168x32xf32, #tpu.memory_space<vmem>>, vector<168x32xf32>
    tpu.vector_store %arg6[%c0, %c0_0], %0 {strides = array<i32>} : memref<168x32xf32, #tpu.memory_space<vmem>>, vector<168x32xf32>,
    %c0_1 = arith.constant 0 : index
    %c0_2 = arith.constant 0 : index
    %c0_3 = arith.constant 0 : index
    %c0_4 = arith.constant 0 : index
    %2 = vector.load %arg2[%c0_1, %c0_2, %c0_3, %c0_4] : memref<1x1x210x64xbf16, #tpu.memory_space<vmem>>, vector<1x1x168x64xbf16>
    %3 = vector.shape_cast %2 : vector<1x1x168x64xbf16> to vector<168x64xbf16>
    %c0_5 = arith.constant 0 : index
    %c0_6 = arith.constant 0 : index
    %c1 = arith.constant 1 : index
    %c0_7 = arith.constant 0 : index
    %4 = vector.load %arg2[%c0_5, %c0_6, %c1, %c0_7] : memref<1x1x210x64xbf16, #tpu.memory_space<vmem>>, vector<1x1x168x64xbf16>
    %5 = vector.shape_cast %4 : vector<1x1x168x64xbf16> to vector<168x64xbf16>
    %c0_8 = arith.constant 0 : index
    %c0_9 = arith.constant 0 : index
    %c2 = arith.constant 2 : index
    %c0_10 = arith.constant 0 : index
    %6 = vector.load %arg2[%c0_8, %c0_9, %c2, %c0_10] : memref<1x1x210x64xbf16, #tpu.memory_space<vmem>>, vector<1x1x168x64xbf16>
    %7 = vector.shape_cast %6 : vector<1x1x168x64xbf16> to vector<168x64xbf16>
    %8 = tpu.concatenate %3, %5, %7 in 1 : vector<168x64xbf16>, vector<168x64xbf16>, vector<168x64xbf16> -> vector<168x192xbf16>
    %c0_11 = arith.constant 0 : index
    %c0_12 = arith.constant 0 : index
    %9 = vector.load %arg6[%c0_11, %c0_12] : memref<168x32xf32, #tpu.memory_space<vmem>>, vector<168x32xf32>
    %c0_13 = arith.constant 0 : index
    %c0_14 = arith.constant 0 : index
    %c0_15 = arith.constant 0 : index
    %10 = vector.load %arg3[%c0_13, %c0_14, %c0_15] : memref<3x192x32xbf16, #tpu.memory_space<vmem>>, vector<1x192x32xbf16>
    %11 = vector.shape_cast %10 : vector<1x192x32xbf16> to vector<192x32xbf16>
    %cst_16 = arith.constant dense<0.000000e+00> : vector<168x32xf32>
    %12 = tpu.matmul %8, %11, %cst_16 {dimension_numbers = #tpu.dot_dimension_numbers<[1], [0], [0], [1], [0, 0, 1, 1], [], []>} : vector<168x192xbf16>, vector<192x32xbf16>, vector<168x32xf32> -> vector<168x32xf32>
    %13 = arith.addf %9, %12 : vector<168x32xf32>
    %c0_17 = arith.constant 0 : index
    %c0_18 = arith.constant 0 : index
    %14 = vector.load %arg6[%c0_17, %c0_18] : memref<168x32xf32, #tpu.memory_space<vmem>>, vector<168x32xf32>
    tpu.vector_store %arg6[%c0_17, %c0_18], %13 {strides = array<i32>} : memref<168x32xf32, #tpu.memory_space<vmem>>, vector<168x32xf32>,
    %c0_19 = arith.constant 0 : index
    %c0_20 = arith.constant 0 : index
    %c14 = arith.constant 14 : index
    %c0_21 = arith.constant 0 : index
    %15 = vector.load %arg2[%c0_19, %c0_20, %c14, %c0_21] : memref<1x1x210x64xbf16, #tpu.memory_space<vmem>>, vector<1x1x168x64xbf16>
    %16 = vector.shape_cast %15 : vector<1x1x168x64xbf16> to vector<168x64xbf16>
    %c0_22 = arith.constant 0 : index
    %c0_23 = arith.constant 0 : index
    %c15 = arith.constant 15 : index
    %c0_24 = arith.constant 0 : index
    %17 = vector.load %arg2[%c0_22, %c0_23, %c15, %c0_24] : memref<1x1x210x64xbf16, #tpu.memory_space<vmem>>, vector<1x1x168x64xbf16>
    %18 = vector.shape_cast %17 : vector<1x1x168x64xbf16> to vector<168x64xbf16>
    %c0_25 = arith.constant 0 : index
    %c0_26 = arith.constant 0 : index
    %c16 = arith.constant 16 : index
    %c0_27 = arith.constant 0 : index
    %19 = vector.load %arg2[%c0_25, %c0_26, %c16, %c0_27] : memref<1x1x210x64xbf16, #tpu.memory_space<vmem>>, vector<1x1x168x64xbf16>
    %20 = vector.shape_cast %19 : vector<1x1x168x64xbf16> to vector<168x64xbf16>
    %21 = tpu.concatenate %16, %18, %20 in 1 : vector<168x64xbf16>, vector<168x64xbf16>, vector<168x64xbf16> -> vector<168x192xbf16>
    %c0_28 = arith.constant 0 : index
    %c0_29 = arith.constant 0 : index
    %22 = vector.load %arg6[%c0_28, %c0_29] : memref<168x32xf32, #tpu.memory_space<vmem>>, vector<168x32xf32>
    %c1_30 = arith.constant 1 : index
    %c0_31 = arith.constant 0 : index
    %c0_32 = arith.constant 0 : index
    %23 = vector.load %arg3[%c1_30, %c0_31, %c0_32] : memref<3x192x32xbf16, #tpu.memory_space<vmem>>, vector<1x192x32xbf16>
    %24 = vector.shape_cast %23 : vector<1x192x32xbf16> to vector<192x32xbf16>
    %cst_33 = arith.constant dense<0.000000e+00> : vector<168x32xf32>
    %25 = tpu.matmul %21, %24, %cst_33 {dimension_numbers = #tpu.dot_dimension_numbers<[1], [0], [0], [1], [0, 0, 1, 1], [], []>} : vector<168x192xbf16>, vector<192x32xbf16>, vector<168x32xf32> -> vector<168x32xf32>
    %26 = arith.addf %22, %25 : vector<168x32xf32>
    %c0_34 = arith.constant 0 : index
    %c0_35 = arith.constant 0 : index
    %27 = vector.load %arg6[%c0_34, %c0_35] : memref<168x32xf32, #tpu.memory_space<vmem>>, vector<168x32xf32>
    tpu.vector_store %arg6[%c0_34, %c0_35], %26 {strides = array<i32>} : memref<168x32xf32, #tpu.memory_space<vmem>>, vector<168x32xf32>,
    %c0_36 = arith.constant 0 : index
    %c0_37 = arith.constant 0 : index
    %c28 = arith.constant 28 : index
    %c0_38 = arith.constant 0 : index
    %28 = vector.load %arg2[%c0_36, %c0_37, %c28, %c0_38] : memref<1x1x210x64xbf16, #tpu.memory_space<vmem>>, vector<1x1x168x64xbf16>
    %29 = vector.shape_cast %28 : vector<1x1x168x64xbf16> to vector<168x64xbf16>
    %c0_39 = arith.constant 0 : index
    %c0_40 = arith.constant 0 : index
    %c29 = arith.constant 29 : index
    %c0_41 = arith.constant 0 : index
    %30 = vector.load %arg2[%c0_39, %c0_40, %c29, %c0_41] : memref<1x1x210x64xbf16, #tpu.memory_space<vmem>>, vector<1x1x168x64xbf16>
    %31 = vector.shape_cast %30 : vector<1x1x168x64xbf16> to vector<168x64xbf16>
    %c0_42 = arith.constant 0 : index
    %c0_43 = arith.constant 0 : index
    %c30 = arith.constant 30 : index
    %c0_44 = arith.constant 0 : index
    %32 = vector.load %arg2[%c0_42, %c0_43, %c30, %c0_44] : memref<1x1x210x64xbf16, #tpu.memory_space<vmem>>, vector<1x1x168x64xbf16>
    %33 = vector.shape_cast %32 : vector<1x1x168x64xbf16> to vector<168x64xbf16>
    %34 = tpu.concatenate %29, %31, %33 in 1 : vector<168x64xbf16>, vector<168x64xbf16>, vector<168x64xbf16> -> vector<168x192xbf16>
    %c0_45 = arith.constant 0 : index
    %c0_46 = arith.constant 0 : index
    %35 = vector.load %arg6[%c0_45, %c0_46] : memref<168x32xf32, #tpu.memory_space<vmem>>, vector<168x32xf32>
    %c2_47 = arith.constant 2 : index
    %c0_48 = arith.constant 0 : index
    %c0_49 = arith.constant 0 : index
    %36 = vector.load %arg3[%c2_47, %c0_48, %c0_49] : memref<3x192x32xbf16, #tpu.memory_space<vmem>>, vector<1x192x32xbf16>
    %37 = vector.shape_cast %36 : vector<1x192x32xbf16> to vector<192x32xbf16>
    %cst_50 = arith.constant dense<0.000000e+00> : vector<168x32xf32>
    %38 = tpu.matmul %34, %37, %cst_50 {dimension_numbers = #tpu.dot_dimension_numbers<[1], [0], [0], [1], [0, 0, 1, 1], [], []>} : vector<168x192xbf16>, vector<192x32xbf16>, vector<168x32xf32> -> vector<168x32xf32>
    %39 = arith.addf %35, %38 : vector<168x32xf32>
    %c0_51 = arith.constant 0 : index
    %c0_52 = arith.constant 0 : index
    %40 = vector.load %arg6[%c0_51, %c0_52] : memref<168x32xf32, #tpu.memory_space<vmem>>, vector<168x32xf32>
    tpu.vector_store %arg6[%c0_51, %c0_52], %39 {strides = array<i32>} : memref<168x32xf32, #tpu.memory_space<vmem>>, vector<168x32xf32>,
    %c0_53 = arith.constant 0 : index
    %c0_54 = arith.constant 0 : index
    %41 = vector.load %arg6[%c0_53, %c0_54] : memref<168x32xf32, #tpu.memory_space<vmem>>, vector<168x32xf32>
    %c0_55 = arith.constant 0 : index
    %c0_56 = arith.constant 0 : index
    %42 = vector.load %arg4[%c0_55, %c0_56] : memref<1x32xf32, #tpu.memory_space<vmem>>, vector<1x32xf32>
    %43 = vector.broadcast %42 : vector<1x32xf32> to vector<168x32xf32>
    %44 = arith.addf %41, %43 : vector<168x32xf32>
    %45 = arith.truncf %44 : vector<168x32xf32> to vector<168x32xbf16>
    %c0_57 = arith.constant 0 : index
    %c0_58 = arith.constant 0 : index
    %c0_59 = arith.constant 0 : index
    %46 = vector.load %arg5[%c0_57, %c0_58, %c0_59] : memref<1x168x32xbf16, #tpu.memory_space<vmem>>, vector<1x168x32xbf16>
    %47 = vector.shape_cast %46 : vector<1x168x32xbf16> to vector<168x32xbf16>
    %48 = vector.shape_cast %45 : vector<168x32xbf16> to vector<1x168x32xbf16>
    tpu.vector_store %arg5[%c0_57, %c0_58, %c0_59], %48 {strides = array<i32>} : memref<1x168x32xbf16, #tpu.memory_space<vmem>>, vector<1x168x32xbf16>,
    return
  }
  func.func @transform_0(%arg0: i32, %arg1: i32) -> (i32, i32, i32, i32) {
    %c0_i32 = arith.constant 0 : i32
    %c0_i32_0 = arith.constant 0 : i32
    %c0_i32_1 = arith.constant 0 : i32
    %c0_i32_2 = arith.constant 0 : i32
    return %c0_i32, %arg1, %c0_i32_0, %c0_i32_1 : i32, i32, i32, i32
  }
  func.func @transform_1(%arg0: i32, %arg1: i32) -> (i32, i32, i32) {
    %c0_i32 = arith.constant 0 : i32
    %c0_i32_0 = arith.constant 0 : i32
    %c0_i32_1 = arith.constant 0 : i32
    return %c0_i32, %c0_i32_0, %arg0 : i32, i32, i32
  }
  func.func @transform_2(%arg0: i32, %arg1: i32) -> (i32, i32) {
    %c0_i32 = arith.constant 0 : i32
    %c0_i32_0 = arith.constant 0 : i32
    return %c0_i32, %arg0 : i32, i32
  }
  func.func @transform_3(%arg0: i32, %arg1: i32) -> (i32, i32, i32) {
    %c0_i32 = arith.constant 0 : i32
    %c0_i32_0 = arith.constant 0 : i32
    return %arg1, %c0_i32, %arg0 : i32, i32, i32
  }
}

</mosaic_0001>

<llo_original>
// kernel: tpu_custom_call.1
$region0: #{tpu_custom_call.1}
  #allocation0 [shape = 'u32[]', space=smem, size = 0x4, offset = 0x4, fixed_abs, tag = 'smem constant byte address 0x4 - core index']
  #allocation1 [shape = 'u32[144,128]{1,0:T(1,128)}', space=vmem, size = 0x12000, scoped, tag = 'internal scratch']
  #allocation2 [shape = 'f32[168,32]{1,0:T(8,128)}', space=vmem, size = 0x15000, scoped, tag = 'scratch operand']
  %s0 = inlined_call_operand.vmem [shape: bf16[1,1,210,64], index: 0, kind: input, shape index: {}]
  %s1 = inlined_call_operand.vmem [shape: bf16[3,192,32], index: 1, kind: input, shape index: {}]
  %s2 = inlined_call_operand.vmem [shape: f32[1,32], index: 2, kind: input, shape index: {}]
  %s3 = inlined_call_operand.vmem [shape: bf16[1,168,32], index: 3, kind: output, shape index: {}]
  %s4 = sld [smem:[#allocation0]]
  $region22: #{tpu_custom_call.1} parent=0
    _
  %s6 = ssub.s32 1, %s4
  %s7 = scalar_select 0, %s6, %s4
  // Predicated region
  $region2: #{tpu_custom_call.1} parent=0 // pred_check
    _
  $region3: #{tpu_custom_call.1} parent=0 // pred_check_branch
    %9 = sbr.rel (0) target = $region5
  $region4: #{tpu_custom_call.1} parent=0 // pred_region
    _
  $region5: #{tpu_custom_call.1} parent=0 // pred_fallthru
    _
  // Predicated region
  $region6: #{tpu_custom_call.1} parent=0 // pred_check
    _
  $region7: #{tpu_custom_call.1} parent=0 // pred_check_branch
    %11 = sbr.rel (0) target = $region9
  $region8: #{tpu_custom_call.1} parent=0 // pred_region
    _
  $region9: #{tpu_custom_call.1} parent=0 // pred_fallthru
    _
  // Predicated region
  $region10: #{tpu_custom_call.1} parent=0 // pred_check
    _
  $region11: #{tpu_custom_call.1} parent=0 // pred_check_branch
    %13 = sbr.rel (0) target = $region13
  $region12: #{tpu_custom_call.1} parent=0 // pred_region
    _
  $region13: #{tpu_custom_call.1} parent=0 // pred_fallthru
    _
  %vm15 = vcmask 261120
  %16 = vst.msk [vmem:[#allocation2] sm:$0xff] %vm15, 0.0
  %17 = vst.msk [vmem:[#allocation2 + $0x8] sm:$0xff] %vm15, 0.0
  %18 = vst.msk [vmem:[#allocation2 + $0x10] sm:$0xff] %vm15, 0.0
  %19 = vst.msk [vmem:[#allocation2 + $0x18] sm:$0xff] %vm15, 0.0
  %20 = vst.msk [vmem:[#allocation2 + $0x20] sm:$0xff] %vm15, 0.0
  %21 = vst.msk [vmem:[#allocation2 + $0x28] sm:$0xff] %vm15, 0.0
  %22 = vst.msk [vmem:[#allocation2 + $0x30] sm:$0xff] %vm15, 0.0
  %23 = vst.msk [vmem:[#allocation2 + $0x38] sm:$0xff] %vm15, 0.0
  %24 = vst.msk [vmem:[#allocation2 + $0x40] sm:$0xff] %vm15, 0.0
  %25 = vst.msk [vmem:[#allocation2 + $0x48] sm:$0xff] %vm15, 0.0
  %26 = vst.msk [vmem:[#allocation2 + $0x50] sm:$0xff] %vm15, 0.0
  %27 = vst.msk [vmem:[#allocation2 + $0x58] sm:$0xff] %vm15, 0.0
  %28 = vst.msk [vmem:[#allocation2 + $0x60] sm:$0xff] %vm15, 0.0
  %29 = vst.msk [vmem:[#allocation2 + $0x68] sm:$0xff] %vm15, 0.0
  %30 = vst.msk [vmem:[#allocation2 + $0x70] sm:$0xff] %vm15, 0.0
  %31 = vst.msk [vmem:[#allocation2 + $0x78] sm:$0xff] %vm15, 0.0
  %32 = vst.msk [vmem:[#allocation2 + $0x80] sm:$0xff] %vm15, 0.0
  %33 = vst.msk [vmem:[#allocation2 + $0x88] sm:$0xff] %vm15, 0.0
  %34 = vst.msk [vmem:[#allocation2 + $0x90] sm:$0xff] %vm15, 0.0
  %35 = vst.msk [vmem:[#allocation2 + $0x98] sm:$0xff] %vm15, 0.0
  %36 = vst.msk [vmem:[#allocation2 + $0xa0] sm:$0xff] %vm15, 0.0
  %v37 = vld [vmem:[%s0] sm:$0xf]
  %v38 = vld [vmem:[%s0 + $0x4] sm:$0xf]
  %v39 = vld [vmem:[%s0 + $0x8] sm:$0xf]
  %v40 = vld [vmem:[%s0 + $0xc] sm:$0xf]
  %v41 = vld [vmem:[%s0 + $0x10] sm:$0xf]
  %v42 = vld [vmem:[%s0 + $0x14] sm:$0xf]
  %v43 = vld [vmem:[%s0 + $0x18] sm:$0xf]
  %v44 = vld [vmem:[%s0 + $0x1c] sm:$0xf]
  %v45 = vld [vmem:[%s0 + $0x20] sm:$0xf]
  %v46 = vld [vmem:[%s0 + $0x24] sm:$0xf]
  %v47 = vld [vmem:[%s0 + $0x28] sm:$0xf]
  %v48 = vld [vmem:[%s0 + $0x2c] sm:$0xf]
  %v49 = vld [vmem:[%s0 + $0x30] sm:$0xf]
  %v50 = vld [vmem:[%s0 + $0x34] sm:$0xf]
  %v51 = vld [vmem:[%s0 + $0x38] sm:$0xf]
  %v52 = vld [vmem:[%s0 + $0x3c] sm:$0xf]
  %v53 = vld [vmem:[%s0 + $0x40] sm:$0xf]
  %v54 = vld [vmem:[%s0 + $0x44] sm:$0xf]
  %v55 = vld [vmem:[%s0 + $0x48] sm:$0xf]
  %v56 = vld [vmem:[%s0 + $0x4c] sm:$0xf]
  %v57 = vld [vmem:[%s0 + $0x50] sm:$0xf]
  %v58 = vld [vmem:[%s0 + $0x54] sm:$0x1]
  %v59 = vld [vmem:[%s0] sm:$0xe]
  %v81 = vunpack.c.l.b16 %v37
  %v82 = vunpack.c.l.b16 %v38
  %v83 = vunpack.c.l.b16 %v39
  %v84 = vunpack.c.l.b16 %v40
  %v85 = vunpack.c.l.b16 %v41
  %v86 = vunpack.c.l.b16 %v42
  %v87 = vunpack.c.l.b16 %v43
  %v88 = vunpack.c.l.b16 %v44
  %v89 = vunpack.c.l.b16 %v45
  %v90 = vunpack.c.l.b16 %v46
  %v91 = vunpack.c.l.b16 %v47
  %v92 = vunpack.c.l.b16 %v48
  %v93 = vunpack.c.l.b16 %v49
  %v94 = vunpack.c.l.b16 %v50
  %v95 = vunpack.c.l.b16 %v51
  %v96 = vunpack.c.l.b16 %v52
  %v97 = vunpack.c.l.b16 %v53
  %v98 = vunpack.c.l.b16 %v54
  %v99 = vunpack.c.l.b16 %v55
  %v100 = vunpack.c.l.b16 %v56
  %v101 = vunpack.c.l.b16 %v57
  %v102 = vpack.c.b16 %v82, %v81
  %v103 = vpack.c.b16 %v84, %v83
  %v104 = vpack.c.b16 %v86, %v85
  %v105 = vpack.c.b16 %v88, %v87
  %v106 = vpack.c.b16 %v90, %v89
  %v107 = vpack.c.b16 %v92, %v91
  %v108 = vpack.c.b16 %v94, %v93
  %v109 = vpack.c.b16 %v96, %v95
  %v110 = vpack.c.b16 %v98, %v97
  %v111 = vpack.c.b16 %v100, %v99
  %v112 = vpack.c.b16 %v101, %v101
  %v114 = vunpack.c.l.b16 %v58
  %v115 = vpack.c.b16 %v114, %v101
  %vm116 = vsmask.f32 7424
  %v118 = vshrl.u32 %v102, 16
  %v120 = vshll.u32 %v102, 16
  %v122 = vrot.slane %v120, 1
  %v123 = vor.u32 %v118, %v122
  %v125 = vshll.u32 %v103, 16
  %v127 = vrot.slane %v125, 1
  %v128 = vsel %vm116, %v123, %v127
  %v129 = vshrl.u32 %v103, 16
  %v131 = vor.u32 %v129, %v127
  %v133 = vshll.u32 %v104, 16
  %v135 = vrot.slane %v133, 1
  %v136 = vsel %vm116, %v131, %v135
  %v137 = vshrl.u32 %v104, 16
  %v139 = vor.u32 %v137, %v135
  %v141 = vshll.u32 %v105, 16
  %v143 = vrot.slane %v141, 1
  %v144 = vsel %vm116, %v139, %v143
  %v145 = vshrl.u32 %v105, 16
  %v147 = vor.u32 %v145, %v143
  %v149 = vshll.u32 %v106, 16
  %v151 = vrot.slane %v149, 1
  %v152 = vsel %vm116, %v147, %v151
  %v153 = vshrl.u32 %v106, 16
  %v155 = vor.u32 %v153, %v151
  %v157 = vshll.u32 %v107, 16
  %v159 = vrot.slane %v157, 1
  %v160 = vsel %vm116, %v155, %v159
  %v161 = vshrl.u32 %v107, 16
  %v163 = vor.u32 %v161, %v159
  %v165 = vshll.u32 %v108, 16
  %v167 = vrot.slane %v165, 1
  %v168 = vsel %vm116, %v163, %v167
  %v169 = vshrl.u32 %v108, 16
  %v171 = vor.u32 %v169, %v167
  %v173 = vshll.u32 %v109, 16
  %v175 = vrot.slane %v173, 1
  %v176 = vsel %vm116, %v171, %v175
  %v177 = vshrl.u32 %v109, 16
  %v179 = vor.u32 %v177, %v175
  %v181 = vshll.u32 %v110, 16
  %v183 = vrot.slane %v181, 1
  %v184 = vsel %vm116, %v179, %v183
  %v185 = vshrl.u32 %v110, 16
  %v187 = vor.u32 %v185, %v183
  %v189 = vshll.u32 %v111, 16
  %v191 = vrot.slane %v189, 1
  %v192 = vsel %vm116, %v187, %v191
  %v193 = vshrl.u32 %v111, 16
  %v195 = vor.u32 %v193, %v191
  %v197 = vshll.u32 %v115, 16
  %v199 = vrot.slane %v197, 1
  %v200 = vsel %vm116, %v195, %v199
  %v201 = vshrl.u32 %v115, 16
  %v203 = vor.u32 %v201, %v199
  %204 = vrot.lane.b32.xlu0 %v128, 64
  %v205 = vpop.permute.xlu0 %204
  %206 = vrot.lane.b32.xlu0 %v136, 64
  %v207 = vpop.permute.xlu0 %206
  %208 = vrot.lane.b32.xlu0 %v144, 64
  %v209 = vpop.permute.xlu0 %208
  %210 = vrot.lane.b32.xlu0 %v152, 64
  %v211 = vpop.permute.xlu0 %210
  %212 = vrot.lane.b32.xlu0 %v160, 64
  %v213 = vpop.permute.xlu0 %212
  %214 = vrot.lane.b32.xlu0 %v168, 64
  %v215 = vpop.permute.xlu0 %214
  %216 = vrot.lane.b32.xlu0 %v176, 64
  %v217 = vpop.permute.xlu0 %216
  %218 = vrot.lane.b32.xlu0 %v184, 64
  %v219 = vpop.permute.xlu0 %218
  %220 = vrot.lane.b32.xlu0 %v192, 64
  %v221 = vpop.permute.xlu0 %220
  %222 = vrot.lane.b32.xlu0 %v200, 64
  %v223 = vpop.permute.xlu0 %222
  %224 = vrot.lane.b32.xlu0 %v203, 64
  %v225 = vpop.permute.xlu0 %224
  %v227 = vunpack.c.l.b16 %v59
  %v228 = vpack.c.b16 %v82, %v227
  %vm229 = vcmask 1046528
  %v230 = vrot.slane %v228, 1
  %v231 = vrot.slane %v103, 1
  %v232 = vsel %vm229, %v230, %v231
  %v233 = vrot.slane %v104, 1
  %v234 = vsel %vm229, %v231, %v233
  %v235 = vrot.slane %v105, 1
  %v236 = vsel %vm229, %v233, %v235
  %v237 = vrot.slane %v106, 1
  %v238 = vsel %vm229, %v235, %v237
  %v239 = vrot.slane %v107, 1
  %v240 = vsel %vm229, %v237, %v239
  %v241 = vrot.slane %v108, 1
  %v242 = vsel %vm229, %v239, %v241
  %v243 = vrot.slane %v109, 1
  %v244 = vsel %vm229, %v241, %v243
  %v245 = vrot.slane %v110, 1
  %v246 = vsel %vm229, %v243, %v245
  %v247 = vrot.slane %v111, 1
  %v248 = vsel %vm229, %v245, %v247
  %v249 = vrot.slane %v115, 1
  %v250 = vsel %vm229, %v247, %v249
  %vm251 = vcmask 523264
  %v253 = vsel %vm251, %v102, %v205
  %v256 = vsel %vm251, %v103, %v207
  %v259 = vsel %vm251, %v104, %v209
  %v262 = vsel %vm251, %v105, %v211
  %v265 = vsel %vm251, %v106, %v213
  %v268 = vsel %vm251, %v107, %v215
  %v271 = vsel %vm251, %v108, %v217
  %v274 = vsel %vm251, %v109, %v219
  %v277 = vsel %vm251, %v110, %v221
  %v280 = vsel %vm251, %v111, %v223
  %v284 = vsel %vm251, %v112, %v225
  %v286 = vld [vmem:[#allocation2] sm:$0xff]
  %v287 = vld [vmem:[#allocation2 + $0x8] sm:$0xff]
  %v288 = vld [vmem:[#allocation2 + $0x10] sm:$0xff]
  %v289 = vld [vmem:[#allocation2 + $0x18] sm:$0xff]
  %v290 = vld [vmem:[#allocation2 + $0x20] sm:$0xff]
  %v291 = vld [vmem:[#allocation2 + $0x28] sm:$0xff]
  %v292 = vld [vmem:[#allocation2 + $0x30] sm:$0xff]
  %v293 = vld [vmem:[#allocation2 + $0x38] sm:$0xff]
  %v294 = vld [vmem:[#allocation2 + $0x40] sm:$0xff]
  %v295 = vld [vmem:[#allocation2 + $0x48] sm:$0xff]
  %v296 = vld [vmem:[#allocation2 + $0x50] sm:$0xff]
  %v297 = vld [vmem:[#allocation2 + $0x58] sm:$0xff]
  %v298 = vld [vmem:[#allocation2 + $0x60] sm:$0xff]
  %v299 = vld [vmem:[#allocation2 + $0x68] sm:$0xff]
  %v300 = vld [vmem:[#allocation2 + $0x70] sm:$0xff]
  %v301 = vld [vmem:[#allocation2 + $0x78] sm:$0xff]
  %v302 = vld [vmem:[#allocation2 + $0x80] sm:$0xff]
  %v303 = vld [vmem:[#allocation2 + $0x88] sm:$0xff]
  %v304 = vld [vmem:[#allocation2 + $0x90] sm:$0xff]
  %v305 = vld [vmem:[#allocation2 + $0x98] sm:$0xff]
  %v306 = vld [vmem:[#allocation2 + $0xa0] sm:$0xff]
  %v307 = vld [vmem:[%s1] sm:$0xf]
  %v308 = vld [vmem:[%s1 + $0x4] sm:$0xf]
  %v309 = vld [vmem:[%s1 + $0x8] sm:$0xf]
  %v310 = vld [vmem:[%s1 + $0xc] sm:$0xf]
  %v311 = vld [vmem:[%s1 + $0x10] sm:$0xf]
  %v312 = vld [vmem:[%s1 + $0x14] sm:$0xf]
  %v313 = vld [vmem:[%s1 + $0x18] sm:$0xf]
  %v314 = vld [vmem:[%s1 + $0x1c] sm:$0xf]
  %v315 = vld [vmem:[%s1 + $0x20] sm:$0xf]
  %v316 = vld [vmem:[%s1 + $0x24] sm:$0xf]
  %v317 = vld [vmem:[%s1 + $0x28] sm:$0xf]
  %v318 = vld [vmem:[%s1 + $0x2c] sm:$0xf]
  %v319 = vld [vmem:[%s1 + $0x30] sm:$0xf]
  %v320 = vld [vmem:[%s1 + $0x34] sm:$0xf]
  %v321 = vld [vmem:[%s1 + $0x38] sm:$0xf]
  %v322 = vld [vmem:[%s1 + $0x3c] sm:$0xf]
  %v323 = vld [vmem:[%s1 + $0x40] sm:$0xf]
  %v324 = vld [vmem:[%s1 + $0x44] sm:$0xf]
  %v325 = vld [vmem:[%s1 + $0x48] sm:$0xf]
  %v326 = vld [vmem:[%s1 + $0x4c] sm:$0xf]
  %v327 = vld [vmem:[%s1 + $0x50] sm:$0xf]
  %v328 = vld [vmem:[%s1 + $0x54] sm:$0xf]
  %v329 = vld [vmem:[%s1 + $0x58] sm:$0xf]
  %v330 = vld [vmem:[%s1 + $0x5c] sm:$0xf]
  %v355 = vunpack.c.l.b16 %v307
  %v356 = vunpack.c.l.b16 %v308
  %v357 = vunpack.c.l.b16 %v309
  %v358 = vunpack.c.l.b16 %v310
  %v359 = vunpack.c.l.b16 %v311
  %v360 = vunpack.c.l.b16 %v312
  %v361 = vunpack.c.l.b16 %v313
  %v362 = vunpack.c.l.b16 %v314
  %v363 = vunpack.c.l.b16 %v315
  %v364 = vunpack.c.l.b16 %v316
  %v365 = vunpack.c.l.b16 %v317
  %v366 = vunpack.c.l.b16 %v318
  %v367 = vunpack.c.l.b16 %v319
  %v368 = vunpack.c.l.b16 %v320
  %v369 = vunpack.c.l.b16 %v321
  %v370 = vunpack.c.l.b16 %v322
  %v371 = vunpack.c.l.b16 %v323
  %v372 = vunpack.c.l.b16 %v324
  %v373 = vunpack.c.l.b16 %v325
  %v374 = vunpack.c.l.b16 %v326
  %v375 = vunpack.c.l.b16 %v327
  %v376 = vunpack.c.l.b16 %v328
  %v377 = vunpack.c.l.b16 %v329
  %v378 = vunpack.c.l.b16 %v330
  %v379 = vpack.c.b16 %v356, %v355
  %v380 = vpack.c.b16 %v358, %v357
  %v381 = vpack.c.b16 %v360, %v359
  %v382 = vpack.c.b16 %v362, %v361
  %v383 = vpack.c.b16 %v364, %v363
  %v384 = vpack.c.b16 %v366, %v365
  %v385 = vpack.c.b16 %v368, %v367
  %v386 = vpack.c.b16 %v370, %v369
  %v387 = vpack.c.b16 %v372, %v371
  %v388 = vpack.c.b16 %v374, %v373
  %v389 = vpack.c.b16 %v376, %v375
  %v390 = vpack.c.b16 %v378, %v377
  %v404 = vsel %vm251, %v232, 0
  %v407 = vsel %vm251, %v234, 0
  %v410 = vsel %vm251, %v236, 0
  %v413 = vsel %vm251, %v238, 0
  %v416 = vsel %vm251, %v240, 0
  %v419 = vsel %vm251, %v242, 0
  %v422 = vsel %vm251, %v244, 0
  %v425 = vsel %vm251, %v246, 0
  %v428 = vsel %vm251, %v248, 0
  %v431 = vsel %vm251, %v250, 0
  %v434 = vsel %vm251, %v249, 0
  %436 = vmatprep.subr.bf16.mxu0 0
  %437 = vmatpush1.bf16.msra.mxu0 %v379
  %438 = vmatprep.subr.bf16.mxu0 0
  %439 = vmatpush1.bf16.msra.mxu0 %v380
  %440 = vmatprep.subr.bf16.mxu0 0
  %441 = vmatpush1.bf16.msra.mxu0 %v381
  %442 = vmatprep.subr.bf16.mxu0 0
  %443 = vmatpush1.bf16.msra.mxu0 %v382
  %444 = vmatprep.subr.bf16.mxu0 0
  %445 = vmatpush1.bf16.msra.mxu0 %v383
  %446 = vmatprep.subr.bf16.mxu0 0
  %447 = vmatpush1.bf16.msra.mxu0 %v384
  %448 = vmatprep.subr.bf16.mxu0 0
  %449 = vmatpush1.bf16.msra.mxu0 %v385
  %450 = vmatprep.subr.bf16.mxu0 0
  %451 = vmatpush1.bf16.msra.mxu0 %v386
  %452 = vmatprep.subr.bf16.mxu0 0
  %453 = vmatpush1.bf16.msra.mxu0 %v387
  %454 = vmatprep.subr.bf16.mxu0 0
  %455 = vmatpush1.bf16.msra.mxu0 %v388
  %456 = vmatprep.subr.bf16.mxu0 0
  %457 = vmatpush1.bf16.msra.mxu0 %v389
  %458 = vmatprep.subr.bf16.mxu0 0
  %459 = vmatpush1.bf16.msra.mxu0 %v390
  %460 = vmatprep.subr.bf16.mxu0 0
  %461 = vmatpush1.bf16.msra.mxu0 0
  %462 = vmatprep.subr.bf16.mxu0 0
  %463 = vmatpush1.bf16.msra.mxu0 0
  %464 = vmatprep.subr.bf16.mxu0 0
  %465 = vmatpush1.bf16.msra.mxu0 0
  %466 = vmatprep.subr.bf16.mxu0 0
  %467 = vmatpush1.bf16.msra.mxu0 0
  %468 = vmatprep.mubr.bf16.mxu0 %v404
  %469 = vmatmul.mubr.bf16.gmra.mrb[0].mxu0 %v253
  %v470 = vpop.f32.mrb[0].mxu0
  %v471 = vadd.f32 0.0, %v470
  %v472 = vpop.f32.mrb[0].mxu0
  %v473 = vpop.f32.mrb[0].mxu0
  %v474 = vadd.f32 0.0, %v473
  %v475 = vpop.f32.mrb[0].mxu0
  %476 = vmatprep.mubr.bf16.mxu0 %v407
  %477 = vmatmul.mubr.bf16.gmra.mrb[0].mxu0 %v256
  %v478 = vpop.f32.mrb[0].mxu0
  %v479 = vadd.f32 0.0, %v478
  %v480 = vpop.f32.mrb[0].mxu0
  %v481 = vpop.f32.mrb[0].mxu0
  %v482 = vadd.f32 0.0, %v481
  %v483 = vpop.f32.mrb[0].mxu0
  %484 = vmatprep.mubr.bf16.mxu0 %v410
  %485 = vmatmul.mubr.bf16.gmra.mrb[0].mxu0 %v259
  %v486 = vpop.f32.mrb[0].mxu0
  %v487 = vadd.f32 0.0, %v486
  %v488 = vpop.f32.mrb[0].mxu0
  %v489 = vpop.f32.mrb[0].mxu0
  %v490 = vadd.f32 0.0, %v489
  %v491 = vpop.f32.mrb[0].mxu0
  %492 = vmatprep.mubr.bf16.mxu0 %v413
  %493 = vmatmul.mubr.bf16.gmra.mrb[0].mxu0 %v262
  %v494 = vpop.f32.mrb[0].mxu0
  %v495 = vadd.f32 0.0, %v494
  %v496 = vpop.f32.mrb[0].mxu0
  %v497 = vpop.f32.mrb[0].mxu0
  %v498 = vadd.f32 0.0, %v497
  %v499 = vpop.f32.mrb[0].mxu0
  %500 = vmatprep.mubr.bf16.mxu0 %v416
  %501 = vmatmul.mubr.bf16.gmra.mrb[0].mxu0 %v265
  %v502 = vpop.f32.mrb[0].mxu0
  %v503 = vadd.f32 0.0, %v502
  %v504 = vpop.f32.mrb[0].mxu0
  %v505 = vpop.f32.mrb[0].mxu0
  %v506 = vadd.f32 0.0, %v505
  %v507 = vpop.f32.mrb[0].mxu0
  %508 = vmatprep.mubr.bf16.mxu0 %v419
  %509 = vmatmul.mubr.bf16.gmra.mrb[0].mxu0 %v268
  %v510 = vpop.f32.mrb[0].mxu0
  %v511 = vadd.f32 0.0, %v510
  %v512 = vpop.f32.mrb[0].mxu0
  %v513 = vpop.f32.mrb[0].mxu0
  %v514 = vadd.f32 0.0, %v513
  %v515 = vpop.f32.mrb[0].mxu0
  %516 = vmatprep.mubr.bf16.mxu0 %v422
  %517 = vmatmul.mubr.bf16.gmra.mrb[0].mxu0 %v271
  %v518 = vpop.f32.mrb[0].mxu0
  %v519 = vadd.f32 0.0, %v518
  %v520 = vpop.f32.mrb[0].mxu0
  %v521 = vpop.f32.mrb[0].mxu0
  %v522 = vadd.f32 0.0, %v521
  %v523 = vpop.f32.mrb[0].mxu0
  %524 = vmatprep.mubr.bf16.mxu0 %v425
  %525 = vmatmul.mubr.bf16.gmra.mrb[0].mxu0 %v274
  %v526 = vpop.f32.mrb[0].mxu0
  %v527 = vadd.f32 0.0, %v526
  %v528 = vpop.f32.mrb[0].mxu0
  %v529 = vpop.f32.mrb[0].mxu0
  %v530 = vadd.f32 0.0, %v529
  %v531 = vpop.f32.mrb[0].mxu0
  %532 = vmatprep.mubr.bf16.mxu0 %v428
  %533 = vmatmul.mubr.bf16.gmra.mrb[0].mxu0 %v277
  %v534 = vpop.f32.mrb[0].mxu0
  %v535 = vadd.f32 0.0, %v534
  %v536 = vpop.f32.mrb[0].mxu0
  %v537 = vpop.f32.mrb[0].mxu0
  %v538 = vadd.f32 0.0, %v537
  %v539 = vpop.f32.mrb[0].mxu0
  %540 = vmatprep.mubr.bf16.mxu0 %v431
  %541 = vmatmul.mubr.bf16.gmra.mrb[0].mxu0 %v280
  %v542 = vpop.f32.mrb[0].mxu0
  %v543 = vadd.f32 0.0, %v542
  %v544 = vpop.f32.mrb[0].mxu0
  %v545 = vpop.f32.mrb[0].mxu0
  %v546 = vadd.f32 0.0, %v545
  %v547 = vpop.f32.mrb[0].mxu0
  %548 = vmatprep.mubr.bf16.mxu0 %v434
  %549 = vmatmul.mubr.bf16.gmra.mrb[0].mxu0 %v284
  %v550 = vpop.f32.mrb[0].mxu0
  %v551 = vadd.f32 0.0, %v550
  %v552 = vpop.f32.mrb[0].mxu0
  %v553 = vpop.f32.mrb[0].mxu0
  %v554 = vpop.f32.mrb[0].mxu0
  %555 = vdwg.mxu0
  %v556 = vadd.f32 %v286, %v471
  %v557 = vadd.f32 %v287, %v474
  %v558 = vadd.f32 %v288, %v479
  %v559 = vadd.f32 %v289, %v482
  %v560 = vadd.f32 %v290, %v487
  %v561 = vadd.f32 %v291, %v490
  %v562 = vadd.f32 %v292, %v495
  %v563 = vadd.f32 %v293, %v498
  %v564 = vadd.f32 %v294, %v503
  %v565 = vadd.f32 %v295, %v506
  %v566 = vadd.f32 %v296, %v511
  %v567 = vadd.f32 %v297, %v514
  %v568 = vadd.f32 %v298, %v519
  %v569 = vadd.f32 %v299, %v522
  %v570 = vadd.f32 %v300, %v527
  %v571 = vadd.f32 %v301, %v530
  %v572 = vadd.f32 %v302, %v535
  %v573 = vadd.f32 %v303, %v538
  %v574 = vadd.f32 %v304, %v543
  %v575 = vadd.f32 %v305, %v546
  %v576 = vadd.f32 %v306, %v551
  %577 = vst.msk [vmem:[#allocation2] sm:$0xff] %vm15, %v556
  %578 = vst.msk [vmem:[#allocation2 + $0x8] sm:$0xff] %vm15, %v557
  %579 = vst.msk [vmem:[#allocation2 + $0x10] sm:$0xff] %vm15, %v558
  %580 = vst.msk [vmem:[#allocation2 + $0x18] sm:$0xff] %vm15, %v559
  %581 = vst.msk [vmem:[#allocation2 + $0x20] sm:$0xff] %vm15, %v560
  %582 = vst.msk [vmem:[#allocation2 + $0x28] sm:$0xff] %vm15, %v561
  %583 = vst.msk [vmem:[#allocation2 + $0x30] sm:$0xff] %vm15, %v562
  %584 = vst.msk [vmem:[#allocation2 + $0x38] sm:$0xff] %vm15, %v563
  %585 = vst.msk [vmem:[#allocation2 + $0x40] sm:$0xff] %vm15, %v564
  %586 = vst.msk [vmem:[#allocation2 + $0x48] sm:$0xff] %vm15, %v565
  %587 = vst.msk [vmem:[#allocation2 + $0x50] sm:$0xff] %vm15, %v566
  %588 = vst.msk [vmem:[#allocation2 + $0x58] sm:$0xff] %vm15, %v567
  %589 = vst.msk [vmem:[#allocation2 + $0x60] sm:$0xff] %vm15, %v568
  %590 = vst.msk [vmem:[#allocation2 + $0x68] sm:$0xff] %vm15, %v569
  %591 = vst.msk [vmem:[#allocation2 + $0x70] sm:$0xff] %vm15, %v570
  %592 = vst.msk [vmem:[#allocation2 + $0x78] sm:$0xff] %vm15, %v571
  %593 = vst.msk [vmem:[#allocation2 + $0x80] sm:$0xff] %vm15, %v572
  %594 = vst.msk [vmem:[#allocation2 + $0x88] sm:$0xff] %vm15, %v573
  %595 = vst.msk [vmem:[#allocation2 + $0x90] sm:$0xff] %vm15, %v574
  %596 = vst.msk [vmem:[#allocation2 + $0x98] sm:$0xff] %vm15, %v575
  %597 = vst.msk [vmem:[#allocation2 + $0xa0] sm:$0xff] %vm15, %v576
  %v598 = vld [vmem:[%s0 + $0x4] sm:$0x8]
  %v599 = vld [vmem:[%s0 + $0x8] sm:$0xf]
  %v600 = vld [vmem:[%s0 + $0xc] sm:$0xf]
  %v601 = vld [vmem:[%s0 + $0x10] sm:$0xf]
  %v602 = vld [vmem:[%s0 + $0x14] sm:$0xf]
  %v603 = vld [vmem:[%s0 + $0x18] sm:$0xf]
  %v604 = vld [vmem:[%s0 + $0x1c] sm:$0xf]
  %v605 = vld [vmem:[%s0 + $0x20] sm:$0xf]
  %v606 = vld [vmem:[%s0 + $0x24] sm:$0xf]
  %v607 = vld [vmem:[%s0 + $0x28] sm:$0xf]
  %v608 = vld [vmem:[%s0 + $0x2c] sm:$0xf]
  %v609 = vld [vmem:[%s0 + $0x30] sm:$0xf]
  %v610 = vld [vmem:[%s0 + $0x34] sm:$0xf]
  %v611 = vld [vmem:[%s0 + $0x38] sm:$0xf]
  %v612 = vld [vmem:[%s0 + $0x3c] sm:$0xf]
  %v613 = vld [vmem:[%s0 + $0x40] sm:$0xf]
  %v614 = vld [vmem:[%s0 + $0x44] sm:$0xf]
  %v615 = vld [vmem:[%s0 + $0x48] sm:$0xf]
  %v616 = vld [vmem:[%s0 + $0x4c] sm:$0xf]
  %v617 = vld [vmem:[%s0 + $0x50] sm:$0xf]
  %v618 = vld [vmem:[%s0 + $0x54] sm:$0xf]
  %v619 = vld [vmem:[%s0 + $0x58] sm:$0x7]
  %v620 = vld [vmem:[%s0 + $0x58] sm:$0xf]
  %v643 = vunpack.c.l.b16 %v598
  %v644 = vunpack.c.l.b16 %v599
  %v645 = vunpack.c.l.b16 %v600
  %v646 = vunpack.c.l.b16 %v601
  %v647 = vunpack.c.l.b16 %v602
  %v648 = vunpack.c.l.b16 %v603
  %v649 = vunpack.c.l.b16 %v604
  %v650 = vunpack.c.l.b16 %v605
  %v651 = vunpack.c.l.b16 %v606
  %v652 = vunpack.c.l.b16 %v607
  %v653 = vunpack.c.l.b16 %v608
  %v654 = vunpack.c.l.b16 %v609
  %v655 = vunpack.c.l.b16 %v610
  %v656 = vunpack.c.l.b16 %v611
  %v657 = vunpack.c.l.b16 %v612
  %v658 = vunpack.c.l.b16 %v613
  %v659 = vunpack.c.l.b16 %v614
  %v660 = vunpack.c.l.b16 %v615
  %v661 = vunpack.c.l.b16 %v616
  %v662 = vunpack.c.l.b16 %v617
  %v663 = vunpack.c.l.b16 %v618
  %v664 = vunpack.c.l.b16 %v619
  %v665 = vpack.c.b16 %v644, %v643
  %v666 = vpack.c.b16 %v646, %v645
  %v667 = vpack.c.b16 %v648, %v647
  %v668 = vpack.c.b16 %v650, %v649
  %v669 = vpack.c.b16 %v652, %v651
  %v670 = vpack.c.b16 %v654, %v653
  %v671 = vpack.c.b16 %v656, %v655
  %v672 = vpack.c.b16 %v658, %v657
  %v673 = vpack.c.b16 %v660, %v659
  %v674 = vpack.c.b16 %v662, %v661
  %v675 = vpack.c.b16 %v664, %v663
  %v677 = vunpack.c.l.b16 %v620
  %v678 = vpack.c.b16 %v677, %v663
  %v680 = vshrl.u32 %v665, 16
  %v682 = vshll.u32 %v665, 16
  %v684 = vrot.slane %v682, 1
  %v685 = vor.u32 %v680, %v684
  %v687 = vshll.u32 %v666, 16
  %v689 = vrot.slane %v687, 1
  %v690 = vsel %vm116, %v685, %v689
  %v691 = vshrl.u32 %v666, 16
  %v693 = vor.u32 %v691, %v689
  %v695 = vshll.u32 %v667, 16
  %v697 = vrot.slane %v695, 1
  %v698 = vsel %vm116, %v693, %v697
  %v699 = vshrl.u32 %v667, 16
  %v701 = vor.u32 %v699, %v697
  %v703 = vshll.u32 %v668, 16
  %v705 = vrot.slane %v703, 1
  %v706 = vsel %vm116, %v701, %v705
  %v707 = vshrl.u32 %v668, 16
  %v709 = vor.u32 %v707, %v705
  %v711 = vshll.u32 %v669, 16
  %v713 = vrot.slane %v711, 1
  %v714 = vsel %vm116, %v709, %v713
  %v715 = vshrl.u32 %v669, 16
  %v717 = vor.u32 %v715, %v713
  %v719 = vshll.u32 %v670, 16
  %v721 = vrot.slane %v719, 1
  %v722 = vsel %vm116, %v717, %v721
  %v723 = vshrl.u32 %v670, 16
  %v725 = vor.u32 %v723, %v721
  %v727 = vshll.u32 %v671, 16
  %v729 = vrot.slane %v727, 1
  %v730 = vsel %vm116, %v725, %v729
  %v731 = vshrl.u32 %v671, 16
  %v733 = vor.u32 %v731, %v729
  %v735 = vshll.u32 %v672, 16
  %v737 = vrot.slane %v735, 1
  %v738 = vsel %vm116, %v733, %v737
  %v739 = vshrl.u32 %v672, 16
  %v741 = vor.u32 %v739, %v737
  %v743 = vshll.u32 %v673, 16
  %v745 = vrot.slane %v743, 1
  %v746 = vsel %vm116, %v741, %v745
  %v747 = vshrl.u32 %v673, 16
  %v749 = vor.u32 %v747, %v745
  %v751 = vshll.u32 %v674, 16
  %v753 = vrot.slane %v751, 1
  %v754 = vsel %vm116, %v749, %v753
  %v755 = vshrl.u32 %v674, 16
  %v757 = vor.u32 %v755, %v753
  %v759 = vshll.u32 %v678, 16
  %v761 = vrot.slane %v759, 1
  %v762 = vsel %vm116, %v757, %v761
  %v763 = vshrl.u32 %v678, 16
  %v765 = vor.u32 %v763, %v761
  %766 = vrot.lane.b32.xlu0 %v690, 64
  %v767 = vpop.permute.xlu0 %766
  %768 = vrot.lane.b32.xlu0 %v698, 64
  %v769 = vpop.permute.xlu0 %768
  %770 = vrot.lane.b32.xlu0 %v706, 64
  %v771 = vpop.permute.xlu0 %770
  %772 = vrot.lane.b32.xlu0 %v714, 64
  %v773 = vpop.permute.xlu0 %772
  %774 = vrot.lane.b32.xlu0 %v722, 64
  %v775 = vpop.permute.xlu0 %774
  %776 = vrot.lane.b32.xlu0 %v730, 64
  %v777 = vpop.permute.xlu0 %776
  %778 = vrot.lane.b32.xlu0 %v738, 64
  %v779 = vpop.permute.xlu0 %778
  %780 = vrot.lane.b32.xlu0 %v746, 64
  %v781 = vpop.permute.xlu0 %780
  %782 = vrot.lane.b32.xlu0 %v754, 64
  %v783 = vpop.permute.xlu0 %782
  %784 = vrot.lane.b32.xlu0 %v762, 64
  %v785 = vpop.permute.xlu0 %784
  %786 = vrot.lane.b32.xlu0 %v765, 64
  %v787 = vpop.permute.xlu0 %786
  %v788 = vpack.c.b16 %v645, %v644
  %v789 = vpack.c.b16 %v647, %v646
  %v790 = vpack.c.b16 %v649, %v648
  %v791 = vpack.c.b16 %v651, %v650
  %v792 = vpack.c.b16 %v653, %v652
  %v793 = vpack.c.b16 %v655, %v654
  %v794 = vpack.c.b16 %v657, %v656
  %v795 = vpack.c.b16 %v659, %v658
  %v796 = vpack.c.b16 %v661, %v660
  %v797 = vpack.c.b16 %v663, %v662
  %v798 = vpack.c.b16 %v677, %v677
  %vm799 = vcmask 1042432
  %v800 = vrot.slane %v788, 5
  %v801 = vrot.slane %v789, 5
  %v802 = vsel %vm799, %v800, %v801
  %v803 = vrot.slane %v790, 5
  %v804 = vsel %vm799, %v801, %v803
  %v805 = vrot.slane %v791, 5
  %v806 = vsel %vm799, %v803, %v805
  %v807 = vrot.slane %v792, 5
  %v808 = vsel %vm799, %v805, %v807
  %v809 = vrot.slane %v793, 5
  %v810 = vsel %vm799, %v807, %v809
  %v811 = vrot.slane %v794, 5
  %v812 = vsel %vm799, %v809, %v811
  %v813 = vrot.slane %v795, 5
  %v814 = vsel %vm799, %v811, %v813
  %v815 = vrot.slane %v796, 5
  %v816 = vsel %vm799, %v813, %v815
  %v817 = vrot.slane %v797, 5
  %v818 = vsel %vm799, %v815, %v817
  %v819 = vrot.slane %v798, 5
  %v820 = vsel %vm799, %v817, %v819
  %v822 = vsel %vm251, %v665, %v767
  %v824 = vsel %vm251, %v666, %v769
  %v826 = vsel %vm251, %v667, %v771
  %v828 = vsel %vm251, %v668, %v773
  %v830 = vsel %vm251, %v669, %v775
  %v832 = vsel %vm251, %v670, %v777
  %v834 = vsel %vm251, %v671, %v779
  %v836 = vsel %vm251, %v672, %v781
  %v838 = vsel %vm251, %v673, %v783
  %v840 = vsel %vm251, %v674, %v785
  %v843 = vsel %vm251, %v675, %v787
  %v844 = vld [vmem:[#allocation2] sm:$0xff]
  %v845 = vld [vmem:[#allocation2 + $0x8] sm:$0xff]
  %v846 = vld [vmem:[#allocation2 + $0x10] sm:$0xff]
  %v847 = vld [vmem:[#allocation2 + $0x18] sm:$0xff]
  %v848 = vld [vmem:[#allocation2 + $0x20] sm:$0xff]
  %v849 = vld [vmem:[#allocation2 + $0x28] sm:$0xff]
  %v850 = vld [vmem:[#allocation2 + $0x30] sm:$0xff]
  %v851 = vld [vmem:[#allocation2 + $0x38] sm:$0xff]
  %v852 = vld [vmem:[#allocation2 + $0x40] sm:$0xff]
  %v853 = vld [vmem:[#allocation2 + $0x48] sm:$0xff]
  %v854 = vld [vmem:[#allocation2 + $0x50] sm:$0xff]
  %v855 = vld [vmem:[#allocation2 + $0x58] sm:$0xff]
  %v856 = vld [vmem:[#allocation2 + $0x60] sm:$0xff]
  %v857 = vld [vmem:[#allocation2 + $0x68] sm:$0xff]
  %v858 = vld [vmem:[#allocation2 + $0x70] sm:$0xff]
  %v859 = vld [vmem:[#allocation2 + $0x78] sm:$0xff]
  %v860 = vld [vmem:[#allocation2 + $0x80] sm:$0xff]
  %v861 = vld [vmem:[#allocation2 + $0x88] sm:$0xff]
  %v862 = vld [vmem:[#allocation2 + $0x90] sm:$0xff]
  %v863 = vld [vmem:[#allocation2 + $0x98] sm:$0xff]
  %v864 = vld [vmem:[#allocation2 + $0xa0] sm:$0xff]
  %s865 = scalar_lea.vmem %s1, 96
  %v866 = vld [vmem:[%s865] sm:$0xf]
  %v867 = vld [vmem:[%s865 + $0x4] sm:$0xf]
  %v868 = vld [vmem:[%s865 + $0x8] sm:$0xf]
  %v869 = vld [vmem:[%s865 + $0xc] sm:$0xf]
  %v870 = vld [vmem:[%s865 + $0x10] sm:$0xf]
  %v871 = vld [vmem:[%s865 + $0x14] sm:$0xf]
  %v872 = vld [vmem:[%s865 + $0x18] sm:$0xf]
  %v873 = vld [vmem:[%s865 + $0x1c] sm:$0xf]
  %v874 = vld [vmem:[%s865 + $0x20] sm:$0xf]
  %v875 = vld [vmem:[%s865 + $0x24] sm:$0xf]
  %v876 = vld [vmem:[%s865 + $0x28] sm:$0xf]
  %v877 = vld [vmem:[%s865 + $0x2c] sm:$0xf]
  %v878 = vld [vmem:[%s865 + $0x30] sm:$0xf]
  %v879 = vld [vmem:[%s865 + $0x34] sm:$0xf]
  %v880 = vld [vmem:[%s865 + $0x38] sm:$0xf]
  %v881 = vld [vmem:[%s865 + $0x3c] sm:$0xf]
  %v882 = vld [vmem:[%s865 + $0x40] sm:$0xf]
  %v883 = vld [vmem:[%s865 + $0x44] sm:$0xf]
  %v884 = vld [vmem:[%s865 + $0x48] sm:$0xf]
  %v885 = vld [vmem:[%s865 + $0x4c] sm:$0xf]
  %v886 = vld [vmem:[%s865 + $0x50] sm:$0xf]
  %v887 = vld [vmem:[%s865 + $0x54] sm:$0xf]
  %v888 = vld [vmem:[%s865 + $0x58] sm:$0xf]
  %v889 = vld [vmem:[%s865 + $0x5c] sm:$0xf]
  %vm901 = vcmask 1044480
  %v902 = vrot.slane %v822, 3
  %v903 = vrot.slane %v824, 3
  %v904 = vsel %vm901, %v902, %v903
  %v905 = vrot.slane %v800, 3
  %v906 = vrot.slane %v802, 3
  %v907 = vsel %vm901, %v905, %v906
  %v908 = vrot.slane %v826, 3
  %v909 = vsel %vm901, %v903, %v908
  %v910 = vrot.slane %v804, 3
  %v911 = vsel %vm901, %v906, %v910
  %v912 = vrot.slane %v828, 3
  %v913 = vsel %vm901, %v908, %v912
  %v914 = vrot.slane %v806, 3
  %v915 = vsel %vm901, %v910, %v914
  %v916 = vrot.slane %v830, 3
  %v917 = vsel %vm901, %v912, %v916
  %v918 = vrot.slane %v808, 3
  %v919 = vsel %vm901, %v914, %v918
  %v920 = vrot.slane %v832, 3
  %v921 = vsel %vm901, %v916, %v920
  %v922 = vrot.slane %v810, 3
  %v923 = vsel %vm901, %v918, %v922
  %v924 = vrot.slane %v834, 3
  %v925 = vsel %vm901, %v920, %v924
  %v926 = vrot.slane %v812, 3
  %v927 = vsel %vm901, %v922, %v926
  %v928 = vrot.slane %v836, 3
  %v929 = vsel %vm901, %v924, %v928
  %v930 = vrot.slane %v814, 3
  %v931 = vsel %vm901, %v926, %v930
  %v932 = vrot.slane %v838, 3
  %v933 = vsel %vm901, %v928, %v932
  %v934 = vrot.slane %v816, 3
  %v935 = vsel %vm901, %v930, %v934
  %v936 = vrot.slane %v840, 3
  %v937 = vsel %vm901, %v932, %v936
  %v938 = vrot.slane %v818, 3
  %v939 = vsel %vm901, %v934, %v938
  %v940 = vrot.slane %v843, 3
  %v941 = vsel %vm901, %v936, %v940
  %v942 = vrot.slane %v820, 3
  %v943 = vsel %vm901, %v938, %v942
  %v979 = vunpack.c.l.b16 %v866
  %v980 = vunpack.c.l.b16 %v867
  %v981 = vunpack.c.l.b16 %v868
  %v982 = vunpack.c.l.b16 %v869
  %v983 = vunpack.c.l.b16 %v870
  %v984 = vunpack.c.l.b16 %v871
  %v985 = vunpack.c.l.b16 %v872
  %v986 = vunpack.c.l.b16 %v873
  %v987 = vunpack.c.l.b16 %v874
  %v988 = vunpack.c.l.b16 %v875
  %v989 = vunpack.c.l.b16 %v876
  %v990 = vunpack.c.l.b16 %v877
  %v991 = vunpack.c.l.b16 %v878
  %v992 = vunpack.c.l.b16 %v879
  %v993 = vunpack.c.l.b16 %v880
  %v994 = vunpack.c.l.b16 %v881
  %v995 = vunpack.c.l.b16 %v882
  %v996 = vunpack.c.l.b16 %v883
  %v997 = vunpack.c.l.b16 %v884
  %v998 = vunpack.c.l.b16 %v885
  %v999 = vunpack.c.l.b16 %v886
  %v1000 = vunpack.c.l.b16 %v887
  %v1001 = vunpack.c.l.b16 %v888
  %v1002 = vunpack.c.l.b16 %v889
  %v1003 = vpack.c.b16 %v980, %v979
  %v1004 = vpack.c.b16 %v982, %v981
  %v1005 = vpack.c.b16 %v984, %v983
  %v1006 = vpack.c.b16 %v986, %v985
  %v1007 = vpack.c.b16 %v988, %v987
  %v1008 = vpack.c.b16 %v990, %v989
  %v1009 = vpack.c.b16 %v992, %v991
  %v1010 = vpack.c.b16 %v994, %v993
  %v1011 = vpack.c.b16 %v996, %v995
  %v1012 = vpack.c.b16 %v998, %v997
  %v1013 = vpack.c.b16 %v1000, %v999
  %v1014 = vpack.c.b16 %v1002, %v1001
  %v1028 = vsel %vm251, %v907, 0
  %v1031 = vsel %vm251, %v911, 0
  %v1034 = vsel %vm251, %v915, 0
  %v1037 = vsel %vm251, %v919, 0
  %v1040 = vsel %vm251, %v923, 0
  %v1043 = vsel %vm251, %v927, 0
  %v1046 = vsel %vm251, %v931, 0
  %v1049 = vsel %vm251, %v935, 0
  %v1052 = vsel %vm251, %v939, 0
  %v1055 = vsel %vm251, %v943, 0
  %v1058 = vsel %vm251, %v942, 0
  %1060 = vmatprep.subr.bf16.mxu0 0
  %1061 = vmatpush1.bf16.msra.mxu0 %v1003
  %1062 = vmatprep.subr.bf16.mxu0 0
  %1063 = vmatpush1.bf16.msra.mxu0 %v1004
  %1064 = vmatprep.subr.bf16.mxu0 0
  %1065 = vmatpush1.bf16.msra.mxu0 %v1005
  %1066 = vmatprep.subr.bf16.mxu0 0
  %1067 = vmatpush1.bf16.msra.mxu0 %v1006
  %1068 = vmatprep.subr.bf16.mxu0 0
  %1069 = vmatpush1.bf16.msra.mxu0 %v1007
  %1070 = vmatprep.subr.bf16.mxu0 0
  %1071 = vmatpush1.bf16.msra.mxu0 %v1008
  %1072 = vmatprep.subr.bf16.mxu0 0
  %1073 = vmatpush1.bf16.msra.mxu0 %v1009
  %1074 = vmatprep.subr.bf16.mxu0 0
  %1075 = vmatpush1.bf16.msra.mxu0 %v1010
  %1076 = vmatprep.subr.bf16.mxu0 0
  %1077 = vmatpush1.bf16.msra.mxu0 %v1011
  %1078 = vmatprep.subr.bf16.mxu0 0
  %1079 = vmatpush1.bf16.msra.mxu0 %v1012
  %1080 = vmatprep.subr.bf16.mxu0 0
  %1081 = vmatpush1.bf16.msra.mxu0 %v1013
  %1082 = vmatprep.subr.bf16.mxu0 0
  %1083 = vmatpush1.bf16.msra.mxu0 %v1014
  %1084 = vmatprep.subr.bf16.mxu0 0
  %1085 = vmatpush1.bf16.msra.mxu0 0
  %1086 = vmatprep.subr.bf16.mxu0 0
  %1087 = vmatpush1.bf16.msra.mxu0 0
  %1088 = vmatprep.subr.bf16.mxu0 0
  %1089 = vmatpush1.bf16.msra.mxu0 0
  %1090 = vmatprep.subr.bf16.mxu0 0
  %1091 = vmatpush1.bf16.msra.mxu0 0
  %1092 = vmatprep.mubr.bf16.mxu0 %v1028
  %1093 = vmatmul.mubr.bf16.gmra.mrb[0].mxu0 %v904
  %v1094 = vpop.f32.mrb[0].mxu0
  %v1095 = vadd.f32 0.0, %v1094
  %v1096 = vpop.f32.mrb[0].mxu0
  %v1097 = vpop.f32.mrb[0].mxu0
  %v1098 = vadd.f32 0.0, %v1097
  %v1099 = vpop.f32.mrb[0].mxu0
  %1100 = vmatprep.mubr.bf16.mxu0 %v1031
  %1101 = vmatmul.mubr.bf16.gmra.mrb[0].mxu0 %v909
  %v1102 = vpop.f32.mrb[0].mxu0
  %v1103 = vadd.f32 0.0, %v1102
  %v1104 = vpop.f32.mrb[0].mxu0
  %v1105 = vpop.f32.mrb[0].mxu0
  %v1106 = vadd.f32 0.0, %v1105
  %v1107 = vpop.f32.mrb[0].mxu0
  %1108 = vmatprep.mubr.bf16.mxu0 %v1034
  %1109 = vmatmul.mubr.bf16.gmra.mrb[0].mxu0 %v913
  %v1110 = vpop.f32.mrb[0].mxu0
  %v1111 = vadd.f32 0.0, %v1110
  %v1112 = vpop.f32.mrb[0].mxu0
  %v1113 = vpop.f32.mrb[0].mxu0
  %v1114 = vadd.f32 0.0, %v1113
  %v1115 = vpop.f32.mrb[0].mxu0
  %1116 = vmatprep.mubr.bf16.mxu0 %v1037
  %1117 = vmatmul.mubr.bf16.gmra.mrb[0].mxu0 %v917
  %v1118 = vpop.f32.mrb[0].mxu0
  %v1119 = vadd.f32 0.0, %v1118
  %v1120 = vpop.f32.mrb[0].mxu0
  %v1121 = vpop.f32.mrb[0].mxu0
  %v1122 = vadd.f32 0.0, %v1121
  %v1123 = vpop.f32.mrb[0].mxu0
  %1124 = vmatprep.mubr.bf16.mxu0 %v1040
  %1125 = vmatmul.mubr.bf16.gmra.mrb[0].mxu0 %v921
  %v1126 = vpop.f32.mrb[0].mxu0
  %v1127 = vadd.f32 0.0, %v1126
  %v1128 = vpop.f32.mrb[0].mxu0
  %v1129 = vpop.f32.mrb[0].mxu0
  %v1130 = vadd.f32 0.0, %v1129
  %v1131 = vpop.f32.mrb[0].mxu0
  %1132 = vmatprep.mubr.bf16.mxu0 %v1043
  %1133 = vmatmul.mubr.bf16.gmra.mrb[0].mxu0 %v925
  %v1134 = vpop.f32.mrb[0].mxu0
  %v1135 = vadd.f32 0.0, %v1134
  %v1136 = vpop.f32.mrb[0].mxu0
  %v1137 = vpop.f32.mrb[0].mxu0
  %v1138 = vadd.f32 0.0, %v1137
  %v1139 = vpop.f32.mrb[0].mxu0
  %1140 = vmatprep.mubr.bf16.mxu0 %v1046
  %1141 = vmatmul.mubr.bf16.gmra.mrb[0].mxu0 %v929
  %v1142 = vpop.f32.mrb[0].mxu0
  %v1143 = vadd.f32 0.0, %v1142
  %v1144 = vpop.f32.mrb[0].mxu0
  %v1145 = vpop.f32.mrb[0].mxu0
  %v1146 = vadd.f32 0.0, %v1145
  %v1147 = vpop.f32.mrb[0].mxu0
  %1148 = vmatprep.mubr.bf16.mxu0 %v1049
  %1149 = vmatmul.mubr.bf16.gmra.mrb[0].mxu0 %v933
  %v1150 = vpop.f32.mrb[0].mxu0
  %v1151 = vadd.f32 0.0, %v1150
  %v1152 = vpop.f32.mrb[0].mxu0
  %v1153 = vpop.f32.mrb[0].mxu0
  %v1154 = vadd.f32 0.0, %v1153
  %v1155 = vpop.f32.mrb[0].mxu0
  %1156 = vmatprep.mubr.bf16.mxu0 %v1052
  %1157 = vmatmul.mubr.bf16.gmra.mrb[0].mxu0 %v937
  %v1158 = vpop.f32.mrb[0].mxu0
  %v1159 = vadd.f32 0.0, %v1158
  %v1160 = vpop.f32.mrb[0].mxu0
  %v1161 = vpop.f32.mrb[0].mxu0
  %v1162 = vadd.f32 0.0, %v1161
  %v1163 = vpop.f32.mrb[0].mxu0
  %1164 = vmatprep.mubr.bf16.mxu0 %v1055
  %1165 = vmatmul.mubr.bf16.gmra.mrb[0].mxu0 %v941
  %v1166 = vpop.f32.mrb[0].mxu0
  %v1167 = vadd.f32 0.0, %v1166
  %v1168 = vpop.f32.mrb[0].mxu0
  %v1169 = vpop.f32.mrb[0].mxu0
  %v1170 = vadd.f32 0.0, %v1169
  %v1171 = vpop.f32.mrb[0].mxu0
  %1172 = vmatprep.mubr.bf16.mxu0 %v1058
  %1173 = vmatmul.mubr.bf16.gmra.mrb[0].mxu0 %v940
  %v1174 = vpop.f32.mrb[0].mxu0
  %v1175 = vadd.f32 0.0, %v1174
  %v1176 = vpop.f32.mrb[0].mxu0
  %v1177 = vpop.f32.mrb[0].mxu0
  %v1178 = vpop.f32.mrb[0].mxu0
  %1179 = vdwg.mxu0
  %v1180 = vadd.f32 %v844, %v1095
  %v1181 = vadd.f32 %v845, %v1098
  %v1182 = vadd.f32 %v846, %v1103
  %v1183 = vadd.f32 %v847, %v1106
  %v1184 = vadd.f32 %v848, %v1111
  %v1185 = vadd.f32 %v849, %v1114
  %v1186 = vadd.f32 %v850, %v1119
  %v1187 = vadd.f32 %v851, %v1122
  %v1188 = vadd.f32 %v852, %v1127
  %v1189 = vadd.f32 %v853, %v1130
  %v1190 = vadd.f32 %v854, %v1135
  %v1191 = vadd.f32 %v855, %v1138
  %v1192 = vadd.f32 %v856, %v1143
  %v1193 = vadd.f32 %v857, %v1146
  %v1194 = vadd.f32 %v858, %v1151
  %v1195 = vadd.f32 %v859, %v1154
  %v1196 = vadd.f32 %v860, %v1159
  %v1197 = vadd.f32 %v861, %v1162
  %v1198 = vadd.f32 %v862, %v1167
  %v1199 = vadd.f32 %v863, %v1170
  %v1200 = vadd.f32 %v864, %v1175
  %1201 = vst.msk [vmem:[#allocation2] sm:$0xff] %vm15, %v1180
  %1202 = vst.msk [vmem:[#allocation2 + $0x8] sm:$0xff] %vm15, %v1181
  %1203 = vst.msk [vmem:[#allocation2 + $0x10] sm:$0xff] %vm15, %v1182
  %1204 = vst.msk [vmem:[#allocation2 + $0x18] sm:$0xff] %vm15, %v1183
  %1205 = vst.msk [vmem:[#allocation2 + $0x20] sm:$0xff] %vm15, %v1184
  %1206 = vst.msk [vmem:[#allocation2 + $0x28] sm:$0xff] %vm15, %v1185
  %1207 = vst.msk [vmem:[#allocation2 + $0x30] sm:$0xff] %vm15, %v1186
  %1208 = vst.msk [vmem:[#allocation2 + $0x38] sm:$0xff] %vm15, %v1187
  %1209 = vst.msk [vmem:[#allocation2 + $0x40] sm:$0xff] %vm15, %v1188
  %1210 = vst.msk [vmem:[#allocation2 + $0x48] sm:$0xff] %vm15, %v1189
  %1211 = vst.msk [vmem:[#allocation2 + $0x50] sm:$0xff] %vm15, %v1190
  %1212 = vst.msk [vmem:[#allocation2 + $0x58] sm:$0xff] %vm15, %v1191
  %1213 = vst.msk [vmem:[#allocation2 + $0x60] sm:$0xff] %vm15, %v1192
  %1214 = vst.msk [vmem:[#allocation2 + $0x68] sm:$0xff] %vm15, %v1193
  %1215 = vst.msk [vmem:[#allocation2 + $0x70] sm:$0xff] %vm15, %v1194
  %1216 = vst.msk [vmem:[#allocation2 + $0x78] sm:$0xff] %vm15, %v1195
  %1217 = vst.msk [vmem:[#allocation2 + $0x80] sm:$0xff] %vm15, %v1196
  %1218 = vst.msk [vmem:[#allocation2 + $0x88] sm:$0xff] %vm15, %v1197
  %1219 = vst.msk [vmem:[#allocation2 + $0x90] sm:$0xff] %vm15, %v1198
  %1220 = vst.msk [vmem:[#allocation2 + $0x98] sm:$0xff] %vm15, %v1199
  %1221 = vst.msk [vmem:[#allocation2 + $0xa0] sm:$0xff] %vm15, %v1200
  %v1222 = vld [vmem:[%s0 + $0xc] sm:$0xc]
  %v1223 = vld [vmem:[%s0 + $0x10] sm:$0xf]
  %v1224 = vld [vmem:[%s0 + $0x14] sm:$0xf]
  %v1225 = vld [vmem:[%s0 + $0x18] sm:$0xf]
  %v1226 = vld [vmem:[%s0 + $0x1c] sm:$0xf]
  %v1227 = vld [vmem:[%s0 + $0x20] sm:$0xf]
  %v1228 = vld [vmem:[%s0 + $0x24] sm:$0xf]
  %v1229 = vld [vmem:[%s0 + $0x28] sm:$0xf]
  %v1230 = vld [vmem:[%s0 + $0x2c] sm:$0xf]
  %v1231 = vld [vmem:[%s0 + $0x30] sm:$0xf]
  %v1232 = vld [vmem:[%s0 + $0x34] sm:$0xf]
  %v1233 = vld [vmem:[%s0 + $0x38] sm:$0xf]
  %v1234 = vld [vmem:[%s0 + $0x3c] sm:$0xf]
  %v1235 = vld [vmem:[%s0 + $0x40] sm:$0xf]
  %v1236 = vld [vmem:[%s0 + $0x44] sm:$0xf]
  %v1237 = vld [vmem:[%s0 + $0x48] sm:$0xf]
  %v1238 = vld [vmem:[%s0 + $0x4c] sm:$0xf]
  %v1239 = vld [vmem:[%s0 + $0x50] sm:$0xf]
  %v1240 = vld [vmem:[%s0 + $0x54] sm:$0xf]
  %v1241 = vld [vmem:[%s0 + $0x58] sm:$0xf]
  %v1242 = vld [vmem:[%s0 + $0x5c] sm:$0xf]
  %v1243 = vld [vmem:[%s0 + $0x60] sm:$0x3]
  %v1244 = vld [vmem:[%s0 + $0x60] sm:$0x7]
  %v1245 = vld [vmem:[%s0 + $0xc] sm:$0x8]
  %v1268 = vunpack.c.l.b16 %v1222
  %v1269 = vunpack.c.l.b16 %v1223
  %v1270 = vunpack.c.l.b16 %v1224
  %v1271 = vunpack.c.l.b16 %v1225
  %v1272 = vunpack.c.l.b16 %v1226
  %v1273 = vunpack.c.l.b16 %v1227
  %v1274 = vunpack.c.l.b16 %v1228
  %v1275 = vunpack.c.l.b16 %v1229
  %v1276 = vunpack.c.l.b16 %v1230
  %v1277 = vunpack.c.l.b16 %v1231
  %v1278 = vunpack.c.l.b16 %v1232
  %v1279 = vunpack.c.l.b16 %v1233
  %v1280 = vunpack.c.l.b16 %v1234
  %v1281 = vunpack.c.l.b16 %v1235
  %v1282 = vunpack.c.l.b16 %v1236
  %v1283 = vunpack.c.l.b16 %v1237
  %v1284 = vunpack.c.l.b16 %v1238
  %v1285 = vunpack.c.l.b16 %v1239
  %v1286 = vunpack.c.l.b16 %v1240
  %v1287 = vunpack.c.l.b16 %v1241
  %v1288 = vunpack.c.l.b16 %v1242
  %v1289 = vunpack.c.l.b16 %v1243
  %v1290 = vpack.c.b16 %v1269, %v1268
  %v1291 = vpack.c.b16 %v1271, %v1270
  %v1292 = vpack.c.b16 %v1273, %v1272
  %v1293 = vpack.c.b16 %v1275, %v1274
  %v1294 = vpack.c.b16 %v1277, %v1276
  %v1295 = vpack.c.b16 %v1279, %v1278
  %v1296 = vpack.c.b16 %v1281, %v1280
  %v1297 = vpack.c.b16 %v1283, %v1282
  %v1298 = vpack.c.b16 %v1285, %v1284
  %v1299 = vpack.c.b16 %v1287, %v1286
  %v1300 = vpack.c.b16 %v1289, %v1288
  %v1302 = vunpack.c.l.b16 %v1244
  %v1303 = vpack.c.b16 %v1302, %v1288
  %v1305 = vshrl.u32 %v1290, 16
  %v1307 = vshll.u32 %v1290, 16
  %v1309 = vrot.slane %v1307, 1
  %v1310 = vor.u32 %v1305, %v1309
  %v1312 = vshll.u32 %v1291, 16
  %v1314 = vrot.slane %v1312, 1
  %v1315 = vsel %vm116, %v1310, %v1314
  %v1316 = vshrl.u32 %v1291, 16
  %v1318 = vor.u32 %v1316, %v1314
  %v1320 = vshll.u32 %v1292, 16
  %v1322 = vrot.slane %v1320, 1
  %v1323 = vsel %vm116, %v1318, %v1322
  %v1324 = vshrl.u32 %v1292, 16
  %v1326 = vor.u32 %v1324, %v1322
  %v1328 = vshll.u32 %v1293, 16
  %v1330 = vrot.slane %v1328, 1
  %v1331 = vsel %vm116, %v1326, %v1330
  %v1332 = vshrl.u32 %v1293, 16
  %v1334 = vor.u32 %v1332, %v1330
  %v1336 = vshll.u32 %v1294, 16
  %v1338 = vrot.slane %v1336, 1
  %v1339 = vsel %vm116, %v1334, %v1338
  %v1340 = vshrl.u32 %v1294, 16
  %v1342 = vor.u32 %v1340, %v1338
  %v1344 = vshll.u32 %v1295, 16
  %v1346 = vrot.slane %v1344, 1
  %v1347 = vsel %vm116, %v1342, %v1346
  %v1348 = vshrl.u32 %v1295, 16
  %v1350 = vor.u32 %v1348, %v1346
  %v1352 = vshll.u32 %v1296, 16
  %v1354 = vrot.slane %v1352, 1
  %v1355 = vsel %vm116, %v1350, %v1354
  %v1356 = vshrl.u32 %v1296, 16
  %v1358 = vor.u32 %v1356, %v1354
  %v1360 = vshll.u32 %v1297, 16
  %v1362 = vrot.slane %v1360, 1
  %v1363 = vsel %vm116, %v1358, %v1362
  %v1364 = vshrl.u32 %v1297, 16
  %v1366 = vor.u32 %v1364, %v1362
  %v1368 = vshll.u32 %v1298, 16
  %v1370 = vrot.slane %v1368, 1
  %v1371 = vsel %vm116, %v1366, %v1370
  %v1372 = vshrl.u32 %v1298, 16
  %v1374 = vor.u32 %v1372, %v1370
  %v1376 = vshll.u32 %v1299, 16
  %v1378 = vrot.slane %v1376, 1
  %v1379 = vsel %vm116, %v1374, %v1378
  %v1380 = vshrl.u32 %v1299, 16
  %v1382 = vor.u32 %v1380, %v1378
  %v1384 = vshll.u32 %v1303, 16
  %v1386 = vrot.slane %v1384, 1
  %v1387 = vsel %vm116, %v1382, %v1386
  %v1388 = vshrl.u32 %v1303, 16
  %v1390 = vor.u32 %v1388, %v1386
  %1391 = vrot.lane.b32.xlu0 %v1315, 64
  %v1392 = vpop.permute.xlu0 %1391
  %1393 = vrot.lane.b32.xlu0 %v1323, 64
  %v1394 = vpop.permute.xlu0 %1393
  %1395 = vrot.lane.b32.xlu0 %v1331, 64
  %v1396 = vpop.permute.xlu0 %1395
  %1397 = vrot.lane.b32.xlu0 %v1339, 64
  %v1398 = vpop.permute.xlu0 %1397
  %1399 = vrot.lane.b32.xlu0 %v1347, 64
  %v1400 = vpop.permute.xlu0 %1399
  %1401 = vrot.lane.b32.xlu0 %v1355, 64
  %v1402 = vpop.permute.xlu0 %1401
  %1403 = vrot.lane.b32.xlu0 %v1363, 64
  %v1404 = vpop.permute.xlu0 %1403
  %1405 = vrot.lane.b32.xlu0 %v1371, 64
  %v1406 = vpop.permute.xlu0 %1405
  %1407 = vrot.lane.b32.xlu0 %v1379, 64
  %v1408 = vpop.permute.xlu0 %1407
  %1409 = vrot.lane.b32.xlu0 %v1387, 64
  %v1410 = vpop.permute.xlu0 %1409
  %1411 = vrot.lane.b32.xlu0 %v1390, 64
  %v1412 = vpop.permute.xlu0 %1411
  %v1414 = vunpack.c.l.b16 %v1245
  %v1415 = vpack.c.b16 %v1269, %v1414
  %v1416 = vrot.slane %v1415, 1
  %v1417 = vrot.slane %v1291, 1
  %v1418 = vsel %vm229, %v1416, %v1417
  %v1419 = vrot.slane %v1292, 1
  %v1420 = vsel %vm229, %v1417, %v1419
  %v1421 = vrot.slane %v1293, 1
  %v1422 = vsel %vm229, %v1419, %v1421
  %v1423 = vrot.slane %v1294, 1
  %v1424 = vsel %vm229, %v1421, %v1423
  %v1425 = vrot.slane %v1295, 1
  %v1426 = vsel %vm229, %v1423, %v1425
  %v1427 = vrot.slane %v1296, 1
  %v1428 = vsel %vm229, %v1425, %v1427
  %v1429 = vrot.slane %v1297, 1
  %v1430 = vsel %vm229, %v1427, %v1429
  %v1431 = vrot.slane %v1298, 1
  %v1432 = vsel %vm229, %v1429, %v1431
  %v1433 = vrot.slane %v1299, 1
  %v1434 = vsel %vm229, %v1431, %v1433
  %v1435 = vrot.slane %v1303, 1
  %v1436 = vsel %vm229, %v1433, %v1435
  %v1438 = vsel %vm251, %v1290, %v1392
  %v1440 = vsel %vm251, %v1291, %v1394
  %v1442 = vsel %vm251, %v1292, %v1396
  %v1444 = vsel %vm251, %v1293, %v1398
  %v1446 = vsel %vm251, %v1294, %v1400
  %v1448 = vsel %vm251, %v1295, %v1402
  %v1450 = vsel %vm251, %v1296, %v1404
  %v1452 = vsel %vm251, %v1297, %v1406
  %v1454 = vsel %vm251, %v1298, %v1408
  %v1456 = vsel %vm251, %v1299, %v1410
  %v1459 = vsel %vm251, %v1300, %v1412
  %v1460 = vld [vmem:[#allocation2] sm:$0xff]
  %v1461 = vld [vmem:[#allocation2 + $0x8] sm:$0xff]
  %v1462 = vld [vmem:[#allocation2 + $0x10] sm:$0xff]
  %v1463 = vld [vmem:[#allocation2 + $0x18] sm:$0xff]
  %v1464 = vld [vmem:[#allocation2 + $0x20] sm:$0xff]
  %v1465 = vld [vmem:[#allocation2 + $0x28] sm:$0xff]
  %v1466 = vld [vmem:[#allocation2 + $0x30] sm:$0xff]
  %v1467 = vld [vmem:[#allocation2 + $0x38] sm:$0xff]
  %v1468 = vld [vmem:[#allocation2 + $0x40] sm:$0xff]
  %v1469 = vld [vmem:[#allocation2 + $0x48] sm:$0xff]
  %v1470 = vld [vmem:[#allocation2 + $0x50] sm:$0xff]
  %v1471 = vld [vmem:[#allocation2 + $0x58] sm:$0xff]
  %v1472 = vld [vmem:[#allocation2 + $0x60] sm:$0xff]
  %v1473 = vld [vmem:[#allocation2 + $0x68] sm:$0xff]
  %v1474 = vld [vmem:[#allocation2 + $0x70] sm:$0xff]
  %v1475 = vld [vmem:[#allocation2 + $0x78] sm:$0xff]
  %v1476 = vld [vmem:[#allocation2 + $0x80] sm:$0xff]
  %v1477 = vld [vmem:[#allocation2 + $0x88] sm:$0xff]
  %v1478 = vld [vmem:[#allocation2 + $0x90] sm:$0xff]
  %v1479 = vld [vmem:[#allocation2 + $0x98] sm:$0xff]
  %v1480 = vld [vmem:[#allocation2 + $0xa0] sm:$0xff]
  %s1481 = scalar_lea.vmem %s1, 192
  %v1482 = vld [vmem:[%s1481] sm:$0xf]
  %v1483 = vld [vmem:[%s1481 + $0x4] sm:$0xf]
  %v1484 = vld [vmem:[%s1481 + $0x8] sm:$0xf]
  %v1485 = vld [vmem:[%s1481 + $0xc] sm:$0xf]
  %v1486 = vld [vmem:[%s1481 + $0x10] sm:$0xf]
  %v1487 = vld [vmem:[%s1481 + $0x14] sm:$0xf]
  %v1488 = vld [vmem:[%s1481 + $0x18] sm:$0xf]
  %v1489 = vld [vmem:[%s1481 + $0x1c] sm:$0xf]
  %v1490 = vld [vmem:[%s1481 + $0x20] sm:$0xf]
  %v1491 = vld [vmem:[%s1481 + $0x24] sm:$0xf]
  %v1492 = vld [vmem:[%s1481 + $0x28] sm:$0xf]
  %v1493 = vld [vmem:[%s1481 + $0x2c] sm:$0xf]
  %v1494 = vld [vmem:[%s1481 + $0x30] sm:$0xf]
  %v1495 = vld [vmem:[%s1481 + $0x34] sm:$0xf]
  %v1496 = vld [vmem:[%s1481 + $0x38] sm:$0xf]
  %v1497 = vld [vmem:[%s1481 + $0x3c] sm:$0xf]
  %v1498 = vld [vmem:[%s1481 + $0x40] sm:$0xf]
  %v1499 = vld [vmem:[%s1481 + $0x44] sm:$0xf]
  %v1500 = vld [vmem:[%s1481 + $0x48] sm:$0xf]
  %v1501 = vld [vmem:[%s1481 + $0x4c] sm:$0xf]
  %v1502 = vld [vmem:[%s1481 + $0x50] sm:$0xf]
  %v1503 = vld [vmem:[%s1481 + $0x54] sm:$0xf]
  %v1504 = vld [vmem:[%s1481 + $0x58] sm:$0xf]
  %v1505 = vld [vmem:[%s1481 + $0x5c] sm:$0xf]
  %vm1517 = vcmask 1045504
  %v1518 = vrot.slane %v1438, 2
  %v1519 = vrot.slane %v1440, 2
  %v1520 = vsel %vm1517, %v1518, %v1519
  %v1521 = vrot.slane %v1418, 2
  %v1522 = vrot.slane %v1420, 2
  %v1523 = vsel %vm1517, %v1521, %v1522
  %v1524 = vrot.slane %v1442, 2
  %v1525 = vsel %vm1517, %v1519, %v1524
  %v1526 = vrot.slane %v1422, 2
  %v1527 = vsel %vm1517, %v1522, %v1526
  %v1528 = vrot.slane %v1444, 2
  %v1529 = vsel %vm1517, %v1524, %v1528
  %v1530 = vrot.slane %v1424, 2
  %v1531 = vsel %vm1517, %v1526, %v1530
  %v1532 = vrot.slane %v1446, 2
  %v1533 = vsel %vm1517, %v1528, %v1532
  %v1534 = vrot.slane %v1426, 2
  %v1535 = vsel %vm1517, %v1530, %v1534
  %v1536 = vrot.slane %v1448, 2
  %v1537 = vsel %vm1517, %v1532, %v1536
  %v1538 = vrot.slane %v1428, 2
  %v1539 = vsel %vm1517, %v1534, %v1538
  %v1540 = vrot.slane %v1450, 2
  %v1541 = vsel %vm1517, %v1536, %v1540
  %v1542 = vrot.slane %v1430, 2
  %v1543 = vsel %vm1517, %v1538, %v1542
  %v1544 = vrot.slane %v1452, 2
  %v1545 = vsel %vm1517, %v1540, %v1544
  %v1546 = vrot.slane %v1432, 2
  %v1547 = vsel %vm1517, %v1542, %v1546
  %v1548 = vrot.slane %v1454, 2
  %v1549 = vsel %vm1517, %v1544, %v1548
  %v1550 = vrot.slane %v1434, 2
  %v1551 = vsel %vm1517, %v1546, %v1550
  %v1552 = vrot.slane %v1456, 2
  %v1553 = vsel %vm1517, %v1548, %v1552
  %v1554 = vrot.slane %v1436, 2
  %v1555 = vsel %vm1517, %v1550, %v1554
  %v1556 = vrot.slane %v1459, 2
  %v1557 = vsel %vm1517, %v1552, %v1556
  %v1558 = vrot.slane %v1435, 2
  %v1559 = vsel %vm1517, %v1554, %v1558
  %v1595 = vunpack.c.l.b16 %v1482
  %v1596 = vunpack.c.l.b16 %v1483
  %v1597 = vunpack.c.l.b16 %v1484
  %v1598 = vunpack.c.l.b16 %v1485
  %v1599 = vunpack.c.l.b16 %v1486
  %v1600 = vunpack.c.l.b16 %v1487
  %v1601 = vunpack.c.l.b16 %v1488
  %v1602 = vunpack.c.l.b16 %v1489
  %v1603 = vunpack.c.l.b16 %v1490
  %v1604 = vunpack.c.l.b16 %v1491
  %v1605 = vunpack.c.l.b16 %v1492
  %v1606 = vunpack.c.l.b16 %v1493
  %v1607 = vunpack.c.l.b16 %v1494
  %v1608 = vunpack.c.l.b16 %v1495
  %v1609 = vunpack.c.l.b16 %v1496
  %v1610 = vunpack.c.l.b16 %v1497
  %v1611 = vunpack.c.l.b16 %v1498
  %v1612 = vunpack.c.l.b16 %v1499
  %v1613 = vunpack.c.l.b16 %v1500
  %v1614 = vunpack.c.l.b16 %v1501
  %v1615 = vunpack.c.l.b16 %v1502
  %v1616 = vunpack.c.l.b16 %v1503
  %v1617 = vunpack.c.l.b16 %v1504
  %v1618 = vunpack.c.l.b16 %v1505
  %v1619 = vpack.c.b16 %v1596, %v1595
  %v1620 = vpack.c.b16 %v1598, %v1597
  %v1621 = vpack.c.b16 %v1600, %v1599
  %v1622 = vpack.c.b16 %v1602, %v1601
  %v1623 = vpack.c.b16 %v1604, %v1603
  %v1624 = vpack.c.b16 %v1606, %v1605
  %v1625 = vpack.c.b16 %v1608, %v1607
  %v1626 = vpack.c.b16 %v1610, %v1609
  %v1627 = vpack.c.b16 %v1612, %v1611
  %v1628 = vpack.c.b16 %v1614, %v1613
  %v1629 = vpack.c.b16 %v1616, %v1615
  %v1630 = vpack.c.b16 %v1618, %v1617
  %v1644 = vsel %vm251, %v1523, 0
  %v1647 = vsel %vm251, %v1527, 0
  %v1650 = vsel %vm251, %v1531, 0
  %v1653 = vsel %vm251, %v1535, 0
  %v1656 = vsel %vm251, %v1539, 0
  %v1659 = vsel %vm251, %v1543, 0
  %v1662 = vsel %vm251, %v1547, 0
  %v1665 = vsel %vm251, %v1551, 0
  %v1668 = vsel %vm251, %v1555, 0
  %v1671 = vsel %vm251, %v1559, 0
  %v1674 = vsel %vm251, %v1558, 0
  %1676 = vmatprep.subr.bf16.mxu0 0
  %1677 = vmatpush1.bf16.msra.mxu0 %v1619
  %1678 = vmatprep.subr.bf16.mxu0 0
  %1679 = vmatpush1.bf16.msra.mxu0 %v1620
  %1680 = vmatprep.subr.bf16.mxu0 0
  %1681 = vmatpush1.bf16.msra.mxu0 %v1621
  %1682 = vmatprep.subr.bf16.mxu0 0
  %1683 = vmatpush1.bf16.msra.mxu0 %v1622
  %1684 = vmatprep.subr.bf16.mxu0 0
  %1685 = vmatpush1.bf16.msra.mxu0 %v1623
  %1686 = vmatprep.subr.bf16.mxu0 0
  %1687 = vmatpush1.bf16.msra.mxu0 %v1624
  %1688 = vmatprep.subr.bf16.mxu0 0
  %1689 = vmatpush1.bf16.msra.mxu0 %v1625
  %1690 = vmatprep.subr.bf16.mxu0 0
  %1691 = vmatpush1.bf16.msra.mxu0 %v1626
  %1692 = vmatprep.subr.bf16.mxu0 0
  %1693 = vmatpush1.bf16.msra.mxu0 %v1627
  %1694 = vmatprep.subr.bf16.mxu0 0
  %1695 = vmatpush1.bf16.msra.mxu0 %v1628
  %1696 = vmatprep.subr.bf16.mxu0 0
  %1697 = vmatpush1.bf16.msra.mxu0 %v1629
  %1698 = vmatprep.subr.bf16.mxu0 0
  %1699 = vmatpush1.bf16.msra.mxu0 %v1630
  %1700 = vmatprep.subr.bf16.mxu0 0
  %1701 = vmatpush1.bf16.msra.mxu0 0
  %1702 = vmatprep.subr.bf16.mxu0 0
  %1703 = vmatpush1.bf16.msra.mxu0 0
  %1704 = vmatprep.subr.bf16.mxu0 0
  %1705 = vmatpush1.bf16.msra.mxu0 0
  %1706 = vmatprep.subr.bf16.mxu0 0
  %1707 = vmatpush1.bf16.msra.mxu0 0
  %1708 = vmatprep.mubr.bf16.mxu0 %v1644
  %1709 = vmatmul.mubr.bf16.gmra.mrb[0].mxu0 %v1520
  %v1710 = vpop.f32.mrb[0].mxu0
  %v1711 = vadd.f32 0.0, %v1710
  %v1712 = vpop.f32.mrb[0].mxu0
  %v1713 = vpop.f32.mrb[0].mxu0
  %v1714 = vadd.f32 0.0, %v1713
  %v1715 = vpop.f32.mrb[0].mxu0
  %1716 = vmatprep.mubr.bf16.mxu0 %v1647
  %1717 = vmatmul.mubr.bf16.gmra.mrb[0].mxu0 %v1525
  %v1718 = vpop.f32.mrb[0].mxu0
  %v1719 = vadd.f32 0.0, %v1718
  %v1720 = vpop.f32.mrb[0].mxu0
  %v1721 = vpop.f32.mrb[0].mxu0
  %v1722 = vadd.f32 0.0, %v1721
  %v1723 = vpop.f32.mrb[0].mxu0
  %1724 = vmatprep.mubr.bf16.mxu0 %v1650
  %1725 = vmatmul.mubr.bf16.gmra.mrb[0].mxu0 %v1529
  %v1726 = vpop.f32.mrb[0].mxu0
  %v1727 = vadd.f32 0.0, %v1726
  %v1728 = vpop.f32.mrb[0].mxu0
  %v1729 = vpop.f32.mrb[0].mxu0
  %v1730 = vadd.f32 0.0, %v1729
  %v1731 = vpop.f32.mrb[0].mxu0
  %1732 = vmatprep.mubr.bf16.mxu0 %v1653
  %1733 = vmatmul.mubr.bf16.gmra.mrb[0].mxu0 %v1533
  %v1734 = vpop.f32.mrb[0].mxu0
  %v1735 = vadd.f32 0.0, %v1734
  %v1736 = vpop.f32.mrb[0].mxu0
  %v1737 = vpop.f32.mrb[0].mxu0
  %v1738 = vadd.f32 0.0, %v1737
  %v1739 = vpop.f32.mrb[0].mxu0
  %1740 = vmatprep.mubr.bf16.mxu0 %v1656
  %1741 = vmatmul.mubr.bf16.gmra.mrb[0].mxu0 %v1537
  %v1742 = vpop.f32.mrb[0].mxu0
  %v1743 = vadd.f32 0.0, %v1742
  %v1744 = vpop.f32.mrb[0].mxu0
  %v1745 = vpop.f32.mrb[0].mxu0
  %v1746 = vadd.f32 0.0, %v1745
  %v1747 = vpop.f32.mrb[0].mxu0
  %1748 = vmatprep.mubr.bf16.mxu0 %v1659
  %1749 = vmatmul.mubr.bf16.gmra.mrb[0].mxu0 %v1541
  %v1750 = vpop.f32.mrb[0].mxu0
  %v1751 = vadd.f32 0.0, %v1750
  %v1752 = vpop.f32.mrb[0].mxu0
  %v1753 = vpop.f32.mrb[0].mxu0
  %v1754 = vadd.f32 0.0, %v1753
  %v1755 = vpop.f32.mrb[0].mxu0
  %1756 = vmatprep.mubr.bf16.mxu0 %v1662
  %1757 = vmatmul.mubr.bf16.gmra.mrb[0].mxu0 %v1545
  %v1758 = vpop.f32.mrb[0].mxu0
  %v1759 = vadd.f32 0.0, %v1758
  %v1760 = vpop.f32.mrb[0].mxu0
  %v1761 = vpop.f32.mrb[0].mxu0
  %v1762 = vadd.f32 0.0, %v1761
  %v1763 = vpop.f32.mrb[0].mxu0
  %1764 = vmatprep.mubr.bf16.mxu0 %v1665
  %1765 = vmatmul.mubr.bf16.gmra.mrb[0].mxu0 %v1549
  %v1766 = vpop.f32.mrb[0].mxu0
  %v1767 = vadd.f32 0.0, %v1766
  %v1768 = vpop.f32.mrb[0].mxu0
  %v1769 = vpop.f32.mrb[0].mxu0
  %v1770 = vadd.f32 0.0, %v1769
  %v1771 = vpop.f32.mrb[0].mxu0
  %1772 = vmatprep.mubr.bf16.mxu0 %v1668
  %1773 = vmatmul.mubr.bf16.gmra.mrb[0].mxu0 %v1553
  %v1774 = vpop.f32.mrb[0].mxu0
  %v1775 = vadd.f32 0.0, %v1774
  %v1776 = vpop.f32.mrb[0].mxu0
  %v1777 = vpop.f32.mrb[0].mxu0
  %v1778 = vadd.f32 0.0, %v1777
  %v1779 = vpop.f32.mrb[0].mxu0
  %1780 = vmatprep.mubr.bf16.mxu0 %v1671
  %1781 = vmatmul.mubr.bf16.gmra.mrb[0].mxu0 %v1557
  %v1782 = vpop.f32.mrb[0].mxu0
  %v1783 = vadd.f32 0.0, %v1782
  %v1784 = vpop.f32.mrb[0].mxu0
  %v1785 = vpop.f32.mrb[0].mxu0
  %v1786 = vadd.f32 0.0, %v1785
  %v1787 = vpop.f32.mrb[0].mxu0
  %1788 = vmatprep.mubr.bf16.mxu0 %v1674
  %1789 = vmatmul.mubr.bf16.gmra.mrb[0].mxu0 %v1556
  %v1790 = vpop.f32.mrb[0].mxu0
  %v1791 = vadd.f32 0.0, %v1790
  %v1792 = vpop.f32.mrb[0].mxu0
  %v1793 = vpop.f32.mrb[0].mxu0
  %v1794 = vpop.f32.mrb[0].mxu0
  %1795 = vdwg.mxu0
  %v1796 = vadd.f32 %v1460, %v1711
  %v1797 = vadd.f32 %v1461, %v1714
  %v1798 = vadd.f32 %v1462, %v1719
  %v1799 = vadd.f32 %v1463, %v1722
  %v1800 = vadd.f32 %v1464, %v1727
  %v1801 = vadd.f32 %v1465, %v1730
  %v1802 = vadd.f32 %v1466, %v1735
  %v1803 = vadd.f32 %v1467, %v1738
  %v1804 = vadd.f32 %v1468, %v1743
  %v1805 = vadd.f32 %v1469, %v1746
  %v1806 = vadd.f32 %v1470, %v1751
  %v1807 = vadd.f32 %v1471, %v1754
  %v1808 = vadd.f32 %v1472, %v1759
  %v1809 = vadd.f32 %v1473, %v1762
  %v1810 = vadd.f32 %v1474, %v1767
  %v1811 = vadd.f32 %v1475, %v1770
  %v1812 = vadd.f32 %v1476, %v1775
  %v1813 = vadd.f32 %v1477, %v1778
  %v1814 = vadd.f32 %v1478, %v1783
  %v1815 = vadd.f32 %v1479, %v1786
  %v1816 = vadd.f32 %v1480, %v1791
  %1817 = vst.msk [vmem:[#allocation2] sm:$0xff] %vm15, %v1796
  %1818 = vst.msk [vmem:[#allocation2 + $0x8] sm:$0xff] %vm15, %v1797
  %1819 = vst.msk [vmem:[#allocation2 + $0x10] sm:$0xff] %vm15, %v1798
  %1820 = vst.msk [vmem:[#allocation2 + $0x18] sm:$0xff] %vm15, %v1799
  %1821 = vst.msk [vmem:[#allocation2 + $0x20] sm:$0xff] %vm15, %v1800
  %1822 = vst.msk [vmem:[#allocation2 + $0x28] sm:$0xff] %vm15, %v1801
  %1823 = vst.msk [vmem:[#allocation2 + $0x30] sm:$0xff] %vm15, %v1802
  %1824 = vst.msk [vmem:[#allocation2 + $0x38] sm:$0xff] %vm15, %v1803
  %1825 = vst.msk [vmem:[#allocation2 + $0x40] sm:$0xff] %vm15, %v1804
  %1826 = vst.msk [vmem:[#allocation2 + $0x48] sm:$0xff] %vm15, %v1805
  %1827 = vst.msk [vmem:[#allocation2 + $0x50] sm:$0xff] %vm15, %v1806
  %1828 = vst.msk [vmem:[#allocation2 + $0x58] sm:$0xff] %vm15, %v1807
  %1829 = vst.msk [vmem:[#allocation2 + $0x60] sm:$0xff] %vm15, %v1808
  %1830 = vst.msk [vmem:[#allocation2 + $0x68] sm:$0xff] %vm15, %v1809
  %1831 = vst.msk [vmem:[#allocation2 + $0x70] sm:$0xff] %vm15, %v1810
  %1832 = vst.msk [vmem:[#allocation2 + $0x78] sm:$0xff] %vm15, %v1811
  %1833 = vst.msk [vmem:[#allocation2 + $0x80] sm:$0xff] %vm15, %v1812
  %1834 = vst.msk [vmem:[#allocation2 + $0x88] sm:$0xff] %vm15, %v1813
  %1835 = vst.msk [vmem:[#allocation2 + $0x90] sm:$0xff] %vm15, %v1814
  %1836 = vst.msk [vmem:[#allocation2 + $0x98] sm:$0xff] %vm15, %v1815
  %1837 = vst.msk [vmem:[#allocation2 + $0xa0] sm:$0xff] %vm15, %v1816
  %v1838 = vld [vmem:[#allocation2] sm:$0xff]
  %v1839 = vld [vmem:[#allocation2 + $0x8] sm:$0xff]
  %v1840 = vld [vmem:[#allocation2 + $0x10] sm:$0xff]
  %v1841 = vld [vmem:[#allocation2 + $0x18] sm:$0xff]
  %v1842 = vld [vmem:[#allocation2 + $0x20] sm:$0xff]
  %v1843 = vld [vmem:[#allocation2 + $0x28] sm:$0xff]
  %v1844 = vld [vmem:[#allocation2 + $0x30] sm:$0xff]
  %v1845 = vld [vmem:[#allocation2 + $0x38] sm:$0xff]
  %v1846 = vld [vmem:[#allocation2 + $0x40] sm:$0xff]
  %v1847 = vld [vmem:[#allocation2 + $0x48] sm:$0xff]
  %v1848 = vld [vmem:[#allocation2 + $0x50] sm:$0xff]
  %v1849 = vld [vmem:[#allocation2 + $0x58] sm:$0xff]
  %v1850 = vld [vmem:[#allocation2 + $0x60] sm:$0xff]
  %v1851 = vld [vmem:[#allocation2 + $0x68] sm:$0xff]
  %v1852 = vld [vmem:[#allocation2 + $0x70] sm:$0xff]
  %v1853 = vld [vmem:[#allocation2 + $0x78] sm:$0xff]
  %v1854 = vld [vmem:[#allocation2 + $0x80] sm:$0xff]
  %v1855 = vld [vmem:[#allocation2 + $0x88] sm:$0xff]
  %v1856 = vld [vmem:[#allocation2 + $0x90] sm:$0xff]
  %v1857 = vld [vmem:[#allocation2 + $0x98] sm:$0xff]
  %v1858 = vld [vmem:[#allocation2 + $0xa0] sm:$0xff]
  %v1859 = vld [vmem:[%s2] sm:$0x1]
  %v1861 = vlaneseq
  %v1862 = vshrl.u32 %v1861, 7
  %v1863 = vsub.s32 0, %v1862
  %v1864 = vrot.slane %v1859, %v1863
  %v1866 = vadd.f32 %v1838, %v1864
  %v1867 = vadd.f32 %v1839, %v1864
  %v1868 = vadd.f32 %v1840, %v1864
  %v1869 = vadd.f32 %v1841, %v1864
  %v1870 = vadd.f32 %v1842, %v1864
  %v1871 = vadd.f32 %v1843, %v1864
  %v1872 = vadd.f32 %v1844, %v1864
  %v1873 = vadd.f32 %v1845, %v1864
  %v1874 = vadd.f32 %v1846, %v1864
  %v1875 = vadd.f32 %v1847, %v1864
  %v1876 = vadd.f32 %v1848, %v1864
  %v1877 = vadd.f32 %v1849, %v1864
  %v1878 = vadd.f32 %v1850, %v1864
  %v1879 = vadd.f32 %v1851, %v1864
  %v1880 = vadd.f32 %v1852, %v1864
  %v1881 = vadd.f32 %v1853, %v1864
  %v1882 = vadd.f32 %v1854, %v1864
  %v1883 = vadd.f32 %v1855, %v1864
  %v1884 = vadd.f32 %v1856, %v1864
  %v1885 = vadd.f32 %v1857, %v1864
  %v1886 = vadd.f32 %v1858, %v1864
  %v1887 = vpack.c.bf16 %v1867, %v1866
  %v1888 = vpack.c.bf16 %v1869, %v1868
  %v1889 = vpack.c.bf16 %v1871, %v1870
  %v1890 = vpack.c.bf16 %v1873, %v1872
  %v1891 = vpack.c.bf16 %v1875, %v1874
  %v1892 = vpack.c.bf16 %v1877, %v1876
  %v1893 = vpack.c.bf16 %v1879, %v1878
  %v1894 = vpack.c.bf16 %v1881, %v1880
  %v1895 = vpack.c.bf16 %v1883, %v1882
  %v1896 = vpack.c.bf16 %v1885, %v1884
  %v1897 = vpack.c.bf16 %v1886, %v1886
  %v1909 = vunpack.c.l.b16 %v1887
  %v1910 = vunpack.c.h.b16 %v1887
  %v1911 = vunpack.c.l.b16 %v1888
  %v1912 = vunpack.c.h.b16 %v1888
  %v1913 = vunpack.c.l.b16 %v1889
  %v1914 = vunpack.c.h.b16 %v1889
  %v1915 = vunpack.c.l.b16 %v1890
  %v1916 = vunpack.c.h.b16 %v1890
  %v1917 = vunpack.c.l.b16 %v1891
  %v1918 = vunpack.c.h.b16 %v1891
  %v1919 = vunpack.c.l.b16 %v1892
  %v1920 = vunpack.c.h.b16 %v1892
  %v1921 = vunpack.c.l.b16 %v1893
  %v1922 = vunpack.c.h.b16 %v1893
  %v1923 = vunpack.c.l.b16 %v1894
  %v1924 = vunpack.c.h.b16 %v1894
  %v1925 = vunpack.c.l.b16 %v1895
  %v1926 = vunpack.c.h.b16 %v1895
  %v1927 = vunpack.c.l.b16 %v1896
  %v1928 = vunpack.c.h.b16 %v1896
  %v1929 = vunpack.c.l.b16 %v1897
  %v1930 = vpack.c.b16 %v1909, %v1909
  %v1931 = vpack.c.b16 %v1910, %v1910
  %v1932 = vpack.c.b16 %v1911, %v1911
  %v1933 = vpack.c.b16 %v1912, %v1912
  %v1934 = vpack.c.b16 %v1913, %v1913
  %v1935 = vpack.c.b16 %v1914, %v1914
  %v1936 = vpack.c.b16 %v1915, %v1915
  %v1937 = vpack.c.b16 %v1916, %v1916
  %v1938 = vpack.c.b16 %v1917, %v1917
  %v1939 = vpack.c.b16 %v1918, %v1918
  %v1940 = vpack.c.b16 %v1919, %v1919
  %v1941 = vpack.c.b16 %v1920, %v1920
  %v1942 = vpack.c.b16 %v1921, %v1921
  %v1943 = vpack.c.b16 %v1922, %v1922
  %v1944 = vpack.c.b16 %v1923, %v1923
  %v1945 = vpack.c.b16 %v1924, %v1924
  %v1946 = vpack.c.b16 %v1925, %v1925
  %v1947 = vpack.c.b16 %v1926, %v1926
  %v1948 = vpack.c.b16 %v1927, %v1927
  %v1949 = vpack.c.b16 %v1928, %v1928
  %v1950 = vpack.c.b16 %v1929, %v1929
  %vm1972 = vcmask 257024
  %1973 = vst.msk [vmem:[%s3] sm:$0xf] %vm1972, %v1930
  %1974 = vst.msk [vmem:[%s3 + $0x4] sm:$0xf] %vm1972, %v1931
  %1975 = vst.msk [vmem:[%s3 + $0x8] sm:$0xf] %vm1972, %v1932
  %1976 = vst.msk [vmem:[%s3 + $0xc] sm:$0xf] %vm1972, %v1933
  %1977 = vst.msk [vmem:[%s3 + $0x10] sm:$0xf] %vm1972, %v1934
  %1978 = vst.msk [vmem:[%s3 + $0x14] sm:$0xf] %vm1972, %v1935
  %1979 = vst.msk [vmem:[%s3 + $0x18] sm:$0xf] %vm1972, %v1936
  %1980 = vst.msk [vmem:[%s3 + $0x1c] sm:$0xf] %vm1972, %v1937
  %1981 = vst.msk [vmem:[%s3 + $0x20] sm:$0xf] %vm1972, %v1938
  %1982 = vst.msk [vmem:[%s3 + $0x24] sm:$0xf] %vm1972, %v1939
  %1983 = vst.msk [vmem:[%s3 + $0x28] sm:$0xf] %vm1972, %v1940
  %1984 = vst.msk [vmem:[%s3 + $0x2c] sm:$0xf] %vm1972, %v1941
  %1985 = vst.msk [vmem:[%s3 + $0x30] sm:$0xf] %vm1972, %v1942
  %1986 = vst.msk [vmem:[%s3 + $0x34] sm:$0xf] %vm1972, %v1943
  %1987 = vst.msk [vmem:[%s3 + $0x38] sm:$0xf] %vm1972, %v1944
  %1988 = vst.msk [vmem:[%s3 + $0x3c] sm:$0xf] %vm1972, %v1945
  %1989 = vst.msk [vmem:[%s3 + $0x40] sm:$0xf] %vm1972, %v1946
  %1990 = vst.msk [vmem:[%s3 + $0x44] sm:$0xf] %vm1972, %v1947
  %1991 = vst.msk [vmem:[%s3 + $0x48] sm:$0xf] %vm1972, %v1948
  %1992 = vst.msk [vmem:[%s3 + $0x4c] sm:$0xf] %vm1972, %v1949
  %1993 = vst.msk [vmem:[%s3 + $0x50] sm:$0xf] %vm1972, %v1950
  // Predicated region
  $region14: #{tpu_custom_call.1} parent=0 // pred_check
    _
  $region15: #{tpu_custom_call.1} parent=0 // pred_check_branch
    %1995 = sbr.rel (0) target = $region17
  $region16: #{tpu_custom_call.1} parent=0 // pred_region
    _
  $region17: #{tpu_custom_call.1} parent=0 // pred_fallthru
    _
  // Predicated region
  $region18: #{tpu_custom_call.1} parent=0 // pred_check
    _
  $region19: #{tpu_custom_call.1} parent=0 // pred_check_branch
    %1997 = sbr.rel (0) target = $region21
  $region20: #{tpu_custom_call.1} parent=0 // pred_region
    _
  $region21: #{tpu_custom_call.1} parent=0 // pred_fallthru
    _

</llo_original>
